<compile_context>
chip_gen: v7x
topology: tpu7x:2x2x1
jax: 0.10.0
libtpu: 0.0.40
codegen_flags: <defaults>
</compile_context>

<pallas_src>
import functools

import numpy as np
import jax
import jax.numpy as jnp
from jax.experimental import pallas as pl
from jax.experimental.pallas import tpu as pltpu


def _bilinear_matrix(out_size: int, in_size: int) -> np.ndarray:
    """Row-stochastic interpolation matrix matching torch bilinear,
    align_corners=False (half-pixel centers, src clamped at 0)."""
    A = np.zeros((out_size, in_size), np.float32)
    scale = in_size / out_size
    for i in range(out_size):
        src = (i + 0.5) * scale - 0.5
        src = max(src, 0.0)
        i0 = min(int(np.floor(src)), in_size - 1)
        i1 = min(i0 + 1, in_size - 1)
        lam = src - i0
        A[i, i0] += 1.0 - lam
        A[i, i1] += lam
    return A


def _pick_b_tile(n: int, hout: int, target_rows: int = 256) -> int:
    """Batch elements per grid step: aim for ~256 matmul rows, but keep at
    least 2 grid steps when the batch allows it (v7x has 2 TensorCores)."""
    bt = max(1, min(n, target_rows // max(hout, 1)))
    while bt > 1 and -(-n // bt) < 2:
        bt //= 2
    return max(bt, 1)


def _decoder_block_kernel(xr_ref, skip_ref, awk_ref, ahbd_ref, wbu_ref,
                          wbs_ref, b_ref, o_ref, *, B_tile, Hin, Hout, Wout,
                          Cs, Cout, WinCx):
    # xr_ref:   (B_tile, Hin,  Win*Cx)   low-res input, (w,c) packed on lanes
    # skip_ref: (B_tile, Hout, Wout*Cs)  skip connection, packed on lanes
    # awk_ref:  (Win*Cx, Wout*Cx)        kron(aw^T, I_Cx), bf16 (constant)
    # ahbd_ref: (B_tile*Hout, B_tile*Hin) kron(I_Bt, ah), bf16 (constant)
    # wbu_ref:  (3, Wout*Cx, Wout*Cout)  banded conv weights, up stream, bf16
    # wbs_ref:  (3, Wout*Cs, Wout*Cout)  banded conv weights, skip stream, bf16
    # b_ref:    (1, Wout*Cout)           bias tiled over W, f32 (constant)
    # o_ref:    (B_tile, Hout, Wout*Cout) lane-dense packed output
    M = B_tile * Hout
    bf16 = jnp.bfloat16

    # ---- bilinear upsample, batch folded into the matmul M dim (2 matmuls) ----
    xr = xr_ref[...].reshape(B_tile * Hin, WinCx).astype(bf16)
    g = jnp.dot(xr, awk_ref[...], preferred_element_type=jnp.float32)   # (B*Hin, Wout*Cx)
    up = jnp.dot(ahbd_ref[...], g.astype(bf16),
                 preferred_element_type=jnp.float32)                    # (M, Wout*Cx)
    sk = skip_ref[...].reshape(M, Wout * Cs).astype(jnp.float32)        # (M, Wout*Cs)

    # Row index within each image: realizes the conv's H-direction SAME
    # padding and keeps folded batch elements from bleeding into each other
    # across the flat sublane roll below.
    h = jax.lax.broadcasted_iota(jnp.int32, (M, 1), 0) % Hout
    row_ok = (h != 0, None, h != Hout - 1)   # validity mask per ky tap

    def tap(a, ky):
        # rows of `a` shifted so row m holds a[m + ky - 1] (zero outside image)
        if ky == 1:
            return a.astype(bf16)
        shifted = pltpu.roll(a, shift=(1 - ky) % M, axis=0)      # XLU rotate
        return jnp.where(row_ok[ky], shifted, jnp.zeros_like(shifted)).astype(bf16)

    # ---- 3x3 conv as 6 accumulated MXU matmuls: kx taps + W padding are
    #      folded into the banded weights, ky taps via the row shift above ----
    acc = None
    for ky in range(3):
        d = (jnp.dot(tap(up, ky), wbu_ref[ky], preferred_element_type=jnp.float32)
             + jnp.dot(tap(sk, ky), wbs_ref[ky], preferred_element_type=jnp.float32))
        acc = d if acc is None else acc + d

    out = jnp.maximum(acc + b_ref[...], 0.0)                    # f32 bias + ReLU
    o_ref[...] = out.reshape(B_tile, Hout, Wout * Cout).astype(o_ref.dtype)


def build_decoder_block(weight, bias, *, x_shape, skip_shape, b_tile=None,
                        out_dtype=jnp.float32):
    """Precompute all weight-derived constants ONCE and return a jitted
    forward(x, skip_x) for fixed shapes.  x: NCHW (N,Cx,Hin,Win),
    skip_x: NCHW (N,Cs,Hout,Wout), weight: (Cout, Cx+Cs, 3, 3), bias: (Cout,)."""
    N, Cx, Hin, Win = x_shape
    Ns, Cs, Hout, Wout = skip_shape
    assert N == Ns
    Ctot = Cx + Cs
    Cout = int(weight.shape[0])
    assert weight.shape == (Cout, Ctot, 3, 3)

    if b_tile is None:
        b_tile = _pick_b_tile(N, Hout)
    n_blocks = -(-N // b_tile)
    n_pad = n_blocks * b_tile
    M = b_tile * Hout

    # ---- constants: host-side weight preprocessing, done once (bf16 for MXU) ----
    ah = _bilinear_matrix(Hout, Hin)                           # (Hout, Hin)
    aw = _bilinear_matrix(Wout, Win)                           # (Wout, Win)
    # kron(aw^T, I_Cx): applies the W bilinear weights in packed (w,c) lanes.
    awk = jnp.asarray(np.kron(aw.T, np.eye(Cx, dtype=np.float32)), jnp.bfloat16)
    # Block-diagonal kron(I_Bt, ah): H bilinear weights with batch folded in M.
    # TODO(synk): for large B_tile*Hout this block-diag form wastes MXU K
    # passes; switch to a per-batch loop / 2-tap formulation at that scale.
    ahbd = jnp.asarray(np.kron(np.eye(b_tile, dtype=np.float32), ah), jnp.bfloat16)

    # Banded conv weights: fold kx taps and SAME padding along W.
    S = np.zeros((3, Wout, Wout), np.float32)
    for kx in range(3):
        for w in range(Wout):
            wi = w + kx - 1
            if 0 <= wi < Wout:
                S[kx, wi, w] = 1.0
    w_np = np.asarray(jax.device_get(weight), np.float32)      # (Cout, Ctot, 3, 3)
    wbu = jnp.asarray(np.einsum('ocyx,xiw->yicwo', w_np[:, :Cx], S)
                      .reshape(3, Wout * Cx, Wout * Cout), jnp.bfloat16)
    wbs = jnp.asarray(np.einsum('ocyx,xiw->yicwo', w_np[:, Cx:], S)
                      .reshape(3, Wout * Cs, Wout * Cout), jnp.bfloat16)
    b_np = np.asarray(jax.device_get(bias), np.float32)
    b_pack = jnp.asarray(np.tile(b_np, Wout).reshape(1, Wout * Cout))

    kernel = functools.partial(_decoder_block_kernel, B_tile=b_tile, Hin=Hin,
                               Hout=Hout, Wout=Wout, Cs=Cs, Cout=Cout,
                               WinCx=Win * Cx)

    call = pl.pallas_call(
        kernel,
        out_shape=jax.ShapeDtypeStruct((n_pad, Hout, Wout * Cout), out_dtype),
        grid=(n_blocks,),
        in_specs=[
            pl.BlockSpec((b_tile, Hin, Win * Cx), lambda n: (n, 0, 0)),
            pl.BlockSpec((b_tile, Hout, Wout * Cs), lambda n: (n, 0, 0)),
            # constants: constant index_map -> DMA'd once, stay VMEM-resident
            pl.BlockSpec((Win * Cx, Wout * Cx), lambda n: (0, 0)),
            pl.BlockSpec((M, b_tile * Hin), lambda n: (0, 0)),
            pl.BlockSpec((3, Wout * Cx, Wout * Cout), lambda n: (0, 0, 0)),
            pl.BlockSpec((3, Wout * Cs, Wout * Cout), lambda n: (0, 0, 0)),
            pl.BlockSpec((1, Wout * Cout), lambda n: (0, 0)),
        ],
        out_specs=pl.BlockSpec((b_tile, Hout, Wout * Cout), lambda n: (n, 0, 0)),
        compiler_params=pltpu.CompilerParams(
            dimension_semantics=("parallel",)),   # batch shards over v7x's 2 TCs
    )

    @jax.jit
    def forward(x, skip_x):
        # NCHW -> lane-packed (H, W*C).
        # TODO(synk): in a full decoder keep activations in this packed/NHWC
        # form end-to-end; these transposes are extra HBM round trips.
        xr = jnp.transpose(x, (0, 2, 3, 1)).reshape(N, Hin, Win * Cx)
        skp = jnp.transpose(skip_x, (0, 2, 3, 1)).reshape(N, Hout, Wout * Cs)
        if n_pad != N:
            pad = ((0, n_pad - N), (0, 0), (0, 0))
            xr = jnp.pad(xr, pad)
            skp = jnp.pad(skp, pad)
        out_pack = call(xr, skp, awk, ahbd, wbu, wbs, b_pack)[:N]
        out_nhwc = out_pack.reshape(N, Hout, Wout, Cout)
        return jnp.transpose(out_nhwc, (0, 3, 1, 2))

    return forward


def _reference(x, skip_x, weight, bias):
    """Pure-JAX f32 reference of the same forward pass (for validation)."""
    N, Cx, Hin, Win = x.shape
    _, Cs, Hout, Wout = skip_x.shape
    ah = jnp.asarray(_bilinear_matrix(Hout, Hin))
    aw = jnp.asarray(_bilinear_matrix(Wout, Win))
    x_up = jnp.einsum('oh,nchw,pw->ncop', ah, x, aw)
    cat = jnp.concatenate([x_up, skip_x], axis=1)
    out = jax.lax.conv_general_dilated(
        cat, weight, window_strides=(1, 1), padding='SAME',
        dimension_numbers=('NCHW', 'OIHW', 'NCHW'))
    out = out + bias[None, :, None, None]
    return jnp.maximum(out, 0.0)


if __name__ == "__main__":
    # Decoder stage upsampling 8x8 -> 16x16.  Cout=16 -> 256 output lanes
    # (full-width for the v6e/v7x MXU, two clean 128-lane passes on v5e).
    N, Cx, Hin, Win = 4, 4, 8, 8        # low-res feature map x
    Cs, Hout, Wout = 4, 16, 16          # skip connection
    input_channels = Cx + Cs            # conv in_channels (8)
    output_channels = 16

    key = jax.random.PRNGKey(0)
    k1, k2, k3, k4 = jax.random.split(key, 4)
    x = jax.random.normal(k1, (N, Cx, Hin, Win), jnp.float32)
    skip_x = jax.random.normal(k2, (N, Cs, Hout, Wout), jnp.float32)
    weight = jax.random.normal(k3, (output_channels, input_channels, 3, 3),
                               jnp.float32) * 0.1
    bias = jax.random.normal(k4, (output_channels,), jnp.float32) * 0.1

    # Constants / kernel built ONCE (per weight update), then reused per call.
    fwd = build_decoder_block(weight, bias, x_shape=x.shape,
                              skip_shape=skip_x.shape)
    out = jax.block_until_ready(fwd(x, skip_x))
    ref = jax.block_until_ready(_reference(x, skip_x, weight, bias))

    assert out.shape == (N, output_channels, Hout, Wout), out.shape
    # bf16 MXU operands -> slightly looser tolerance than the all-f32 version.
    err = float(np.max(np.abs(np.asarray(out) - np.asarray(ref))))
    assert np.allclose(np.asarray(out), np.asarray(ref), atol=5e-2, rtol=5e-2), err

    print("KERNEL_OK")
</pallas_src>

<mosaic_0001>
module attributes {stable_mosaic.version = 11 : i64} {
  func.func @_decoder_block_kernel(%arg0: i32, %arg1: memref<2x8x32xf32, #tpu.memory_space<vmem>>, %arg2: memref<2x16x64xf32, #tpu.memory_space<vmem>>, %arg3: memref<32x64xbf16, #tpu.memory_space<vmem>>, %arg4: memref<32x16xbf16, #tpu.memory_space<vmem>>, %arg5: memref<3x64x256xbf16, #tpu.memory_space<vmem>>, %arg6: memref<3x64x256xbf16, #tpu.memory_space<vmem>>, %arg7: memref<1x256xf32, #tpu.memory_space<vmem>>, %arg8: memref<2x16x256xf32, #tpu.memory_space<vmem>>) attributes {dimension_semantics = [#tpu.dimension_semantics<parallel>], iteration_bounds = array<i64: 2>, scalar_prefetch = 0 : i64, scratch_operands = 0 : i64, tpu.core_type = #tpu.core_type<tc>, window_params = [{transform_indices = @transform_0, window_bounds = array<i64: 2, 8, 32>}, {transform_indices = @transform_1, window_bounds = array<i64: 2, 16, 64>}, {pipeline_mode = #tpu.pipeline_mode<synchronous>, transform_indices = @transform_2, window_bounds = array<i64: 32, 64>}, {pipeline_mode = #tpu.pipeline_mode<synchronous>, transform_indices = @transform_3, window_bounds = array<i64: 32, 16>}, {pipeline_mode = #tpu.pipeline_mode<synchronous>, transform_indices = @transform_4, window_bounds = array<i64: 3, 64, 256>}, {pipeline_mode = #tpu.pipeline_mode<synchronous>, transform_indices = @transform_5, window_bounds = array<i64: 3, 64, 256>}, {pipeline_mode = #tpu.pipeline_mode<synchronous>, transform_indices = @transform_6, window_bounds = array<i64: 1, 256>}, {transform_indices = @transform_7, window_bounds = array<i64: 2, 16, 256>}]} {
    %c0 = arith.constant 0 : index
    %c0_0 = arith.constant 0 : index
    %c0_1 = arith.constant 0 : index
    %0 = vector.load %arg1[%c0, %c0_0, %c0_1] : memref<2x8x32xf32, #tpu.memory_space<vmem>>, vector<2x8x32xf32>
    %1 = vector.shape_cast %0 : vector<2x8x32xf32> to vector<16x32xf32>
    %2 = arith.truncf %1 : vector<16x32xf32> to vector<16x32xbf16>
    %c0_2 = arith.constant 0 : index
    %c0_3 = arith.constant 0 : index
    %3 = vector.load %arg3[%c0_2, %c0_3] : memref<32x64xbf16, #tpu.memory_space<vmem>>, vector<32x64xbf16>
    %cst = arith.constant dense<0.000000e+00> : vector<16x64xf32>
    %4 = tpu.matmul %2, %3, %cst {dimension_numbers = #tpu.dot_dimension_numbers<[1], [0], [0], [1], [0, 0, 1, 1], [], []>} : vector<16x32xbf16>, vector<32x64xbf16>, vector<16x64xf32> -> vector<16x64xf32>
    %c0_4 = arith.constant 0 : index
    %c0_5 = arith.constant 0 : index
    %5 = vector.load %arg4[%c0_4, %c0_5] : memref<32x16xbf16, #tpu.memory_space<vmem>>, vector<32x16xbf16>
    %6 = arith.truncf %4 : vector<16x64xf32> to vector<16x64xbf16>
    %cst_6 = arith.constant dense<0.000000e+00> : vector<32x64xf32>
    %7 = tpu.matmul %5, %6, %cst_6 {dimension_numbers = #tpu.dot_dimension_numbers<[1], [0], [0], [1], [0, 0, 1, 1], [], []>} : vector<32x16xbf16>, vector<16x64xbf16>, vector<32x64xf32> -> vector<32x64xf32>
    %c0_7 = arith.constant 0 : index
    %c0_8 = arith.constant 0 : index
    %c0_9 = arith.constant 0 : index
    %8 = vector.load %arg2[%c0_7, %c0_8, %c0_9] : memref<2x16x64xf32, #tpu.memory_space<vmem>>, vector<2x16x64xf32>
    %9 = vector.shape_cast %8 : vector<2x16x64xf32> to vector<32x64xf32>
    %10 = tpu.iota {dimensions = array<i32: 0>} : vector<32x1xi32>
    %c16_i32 = arith.constant 16 : i32
    %c0_i32 = arith.constant 0 : i32
    %11 = arith.cmpi eq, %c16_i32, %c0_i32 : i32
    %c1_i32 = arith.constant 1 : i32
    %12 = arith.select %11, %c1_i32, %c16_i32 : i32
    %13 = vector.broadcast %12 : i32 to vector<32x1xi32>
    %14 = arith.remsi %10, %13 : vector<32x1xi32>
    %c0_i32_10 = arith.constant 0 : i32
    %15 = vector.broadcast %c0_i32_10 : i32 to vector<32x1xi32>
    %16 = arith.cmpi ne, %14, %15 : vector<32x1xi32>
    %c0_i32_11 = arith.constant 0 : i32
    %17 = vector.broadcast %c0_i32_11 : i32 to vector<32x1xi32>
    %18 = arith.cmpi slt, %14, %17 : vector<32x1xi32>
    %c0_i32_12 = arith.constant 0 : i32
    %19 = arith.cmpi slt, %12, %c0_i32_12 : i32
    %20 = vector.broadcast %19 : i1 to vector<32x1xi1>
    %21 = vector.broadcast %20 : vector<32x1xi1> to vector<32x1xi1>
    %22 = arith.xori %18, %21 : vector<32x1xi1>
    %23 = arith.andi %22, %16 : vector<32x1xi1>
    %24 = vector.broadcast %12 : i32 to vector<32x1xi32>
    %25 = arith.addi %14, %24 : vector<32x1xi32>
    %26 = arith.select %23, %25, %14 : vector<32x1xi1>, vector<32x1xi32>
    %c0_i32_13 = arith.constant 0 : i32
    %27 = vector.broadcast %c0_i32_13 : i32 to vector<32x1xi32>
    %28 = arith.cmpi ne, %26, %27 : vector<32x1xi32>
    %c15_i32 = arith.constant 15 : i32
    %29 = vector.broadcast %c15_i32 : i32 to vector<32x1xi32>
    %30 = arith.cmpi ne, %26, %29 : vector<32x1xi32>
    %c1_i32_14 = arith.constant 1 : i32
    %31 = tpu.dynamic_rotate %7 by %c1_i32_14 dim 0 : vector<32x64xf32>, i32 -> vector<32x64xf32>
    %cst_15 = arith.constant 0.000000e+00 : f32
    %32 = vector.broadcast %cst_15 : f32 to vector<32x64xf32>
    %33 = vector.shape_cast %28 : vector<32x1xi1> to vector<32x1xi1>
    %34 = vector.broadcast %33 : vector<32x1xi1> to vector<32x64xi1>
    %35 = arith.select %34, %31, %32 : vector<32x64xi1>, vector<32x64xf32>
    %36 = arith.truncf %35 : vector<32x64xf32> to vector<32x64xbf16>
    %c0_16 = arith.constant 0 : index
    %c0_17 = arith.constant 0 : index
    %c0_18 = arith.constant 0 : index
    %37 = vector.load %arg5[%c0_16, %c0_17, %c0_18] : memref<3x64x256xbf16, #tpu.memory_space<vmem>>, vector<1x64x256xbf16>
    %38 = vector.shape_cast %37 : vector<1x64x256xbf16> to vector<64x256xbf16>
    %cst_19 = arith.constant dense<0.000000e+00> : vector<32x256xf32>
    %39 = tpu.matmul %36, %38, %cst_19 {dimension_numbers = #tpu.dot_dimension_numbers<[1], [0], [0], [1], [0, 0, 1, 1], [], []>} : vector<32x64xbf16>, vector<64x256xbf16>, vector<32x256xf32> -> vector<32x256xf32>
    %c1_i32_20 = arith.constant 1 : i32
    %40 = tpu.dynamic_rotate %9 by %c1_i32_20 dim 0 : vector<32x64xf32>, i32 -> vector<32x64xf32>
    %cst_21 = arith.constant 0.000000e+00 : f32
    %41 = vector.broadcast %cst_21 : f32 to vector<32x64xf32>
    %42 = vector.shape_cast %28 : vector<32x1xi1> to vector<32x1xi1>
    %43 = vector.broadcast %42 : vector<32x1xi1> to vector<32x64xi1>
    %44 = arith.select %43, %40, %41 : vector<32x64xi1>, vector<32x64xf32>
    %45 = arith.truncf %44 : vector<32x64xf32> to vector<32x64xbf16>
    %c0_22 = arith.constant 0 : index
    %c0_23 = arith.constant 0 : index
    %c0_24 = arith.constant 0 : index
    %46 = vector.load %arg6[%c0_22, %c0_23, %c0_24] : memref<3x64x256xbf16, #tpu.memory_space<vmem>>, vector<1x64x256xbf16>
    %47 = vector.shape_cast %46 : vector<1x64x256xbf16> to vector<64x256xbf16>
    %cst_25 = arith.constant dense<0.000000e+00> : vector<32x256xf32>
    %48 = tpu.matmul %45, %47, %cst_25 {dimension_numbers = #tpu.dot_dimension_numbers<[1], [0], [0], [1], [0, 0, 1, 1], [], []>} : vector<32x64xbf16>, vector<64x256xbf16>, vector<32x256xf32> -> vector<32x256xf32>
    %49 = arith.addf %39, %48 : vector<32x256xf32>
    %50 = arith.truncf %7 : vector<32x64xf32> to vector<32x64xbf16>
    %c1 = arith.constant 1 : index
    %c0_26 = arith.constant 0 : index
    %c0_27 = arith.constant 0 : index
    %51 = vector.load %arg5[%c1, %c0_26, %c0_27] : memref<3x64x256xbf16, #tpu.memory_space<vmem>>, vector<1x64x256xbf16>
    %52 = vector.shape_cast %51 : vector<1x64x256xbf16> to vector<64x256xbf16>
    %cst_28 = arith.constant dense<0.000000e+00> : vector<32x256xf32>
    %53 = tpu.matmul %50, %52, %cst_28 {dimension_numbers = #tpu.dot_dimension_numbers<[1], [0], [0], [1], [0, 0, 1, 1], [], []>} : vector<32x64xbf16>, vector<64x256xbf16>, vector<32x256xf32> -> vector<32x256xf32>
    %54 = arith.truncf %9 : vector<32x64xf32> to vector<32x64xbf16>
    %c1_29 = arith.constant 1 : index
    %c0_30 = arith.constant 0 : index
    %c0_31 = arith.constant 0 : index
    %55 = vector.load %arg6[%c1_29, %c0_30, %c0_31] : memref<3x64x256xbf16, #tpu.memory_space<vmem>>, vector<1x64x256xbf16>
    %56 = vector.shape_cast %55 : vector<1x64x256xbf16> to vector<64x256xbf16>
    %cst_32 = arith.constant dense<0.000000e+00> : vector<32x256xf32>
    %57 = tpu.matmul %54, %56, %cst_32 {dimension_numbers = #tpu.dot_dimension_numbers<[1], [0], [0], [1], [0, 0, 1, 1], [], []>} : vector<32x64xbf16>, vector<64x256xbf16>, vector<32x256xf32> -> vector<32x256xf32>
    %58 = arith.addf %53, %57 : vector<32x256xf32>
    %59 = arith.addf %49, %58 : vector<32x256xf32>
    %c31_i32 = arith.constant 31 : i32
    %60 = tpu.dynamic_rotate %7 by %c31_i32 dim 0 : vector<32x64xf32>, i32 -> vector<32x64xf32>
    %cst_33 = arith.constant 0.000000e+00 : f32
    %61 = vector.broadcast %cst_33 : f32 to vector<32x64xf32>
    %62 = vector.shape_cast %30 : vector<32x1xi1> to vector<32x1xi1>
    %63 = vector.broadcast %62 : vector<32x1xi1> to vector<32x64xi1>
    %64 = arith.select %63, %60, %61 : vector<32x64xi1>, vector<32x64xf32>
    %65 = arith.truncf %64 : vector<32x64xf32> to vector<32x64xbf16>
    %c2 = arith.constant 2 : index
    %c0_34 = arith.constant 0 : index
    %c0_35 = arith.constant 0 : index
    %66 = vector.load %arg5[%c2, %c0_34, %c0_35] : memref<3x64x256xbf16, #tpu.memory_space<vmem>>, vector<1x64x256xbf16>
    %67 = vector.shape_cast %66 : vector<1x64x256xbf16> to vector<64x256xbf16>
    %cst_36 = arith.constant dense<0.000000e+00> : vector<32x256xf32>
    %68 = tpu.matmul %65, %67, %cst_36 {dimension_numbers = #tpu.dot_dimension_numbers<[1], [0], [0], [1], [0, 0, 1, 1], [], []>} : vector<32x64xbf16>, vector<64x256xbf16>, vector<32x256xf32> -> vector<32x256xf32>
    %c31_i32_37 = arith.constant 31 : i32
    %69 = tpu.dynamic_rotate %9 by %c31_i32_37 dim 0 : vector<32x64xf32>, i32 -> vector<32x64xf32>
    %cst_38 = arith.constant 0.000000e+00 : f32
    %70 = vector.broadcast %cst_38 : f32 to vector<32x64xf32>
    %71 = vector.shape_cast %30 : vector<32x1xi1> to vector<32x1xi1>
    %72 = vector.broadcast %71 : vector<32x1xi1> to vector<32x64xi1>
    %73 = arith.select %72, %69, %70 : vector<32x64xi1>, vector<32x64xf32>
    %74 = arith.truncf %73 : vector<32x64xf32> to vector<32x64xbf16>
    %c2_39 = arith.constant 2 : index
    %c0_40 = arith.constant 0 : index
    %c0_41 = arith.constant 0 : index
    %75 = vector.load %arg6[%c2_39, %c0_40, %c0_41] : memref<3x64x256xbf16, #tpu.memory_space<vmem>>, vector<1x64x256xbf16>
    %76 = vector.shape_cast %75 : vector<1x64x256xbf16> to vector<64x256xbf16>
    %cst_42 = arith.constant dense<0.000000e+00> : vector<32x256xf32>
    %77 = tpu.matmul %74, %76, %cst_42 {dimension_numbers = #tpu.dot_dimension_numbers<[1], [0], [0], [1], [0, 0, 1, 1], [], []>} : vector<32x64xbf16>, vector<64x256xbf16>, vector<32x256xf32> -> vector<32x256xf32>
    %78 = arith.addf %68, %77 : vector<32x256xf32>
    %79 = arith.addf %59, %78 : vector<32x256xf32>
    %c0_43 = arith.constant 0 : index
    %c0_44 = arith.constant 0 : index
    %80 = vector.load %arg7[%c0_43, %c0_44] : memref<1x256xf32, #tpu.memory_space<vmem>>, vector<1x256xf32>
    %81 = vector.broadcast %80 : vector<1x256xf32> to vector<32x256xf32>
    %82 = arith.addf %79, %81 : vector<32x256xf32>
    %cst_45 = arith.constant 0.000000e+00 : f32
    %83 = vector.broadcast %cst_45 : f32 to vector<32x256xf32>
    %84 = arith.maximumf %82, %83 : vector<32x256xf32>
    %85 = vector.shape_cast %84 : vector<32x256xf32> to vector<2x16x256xf32>
    %c0_46 = arith.constant 0 : index
    %c0_47 = arith.constant 0 : index
    %c0_48 = arith.constant 0 : index
    %86 = vector.load %arg8[%c0_46, %c0_47, %c0_48] : memref<2x16x256xf32, #tpu.memory_space<vmem>>, vector<2x16x256xf32>
    tpu.vector_store %arg8[%c0_46, %c0_47, %c0_48], %85 {strides = array<i32>} : memref<2x16x256xf32, #tpu.memory_space<vmem>>, vector<2x16x256xf32>,
    return
  }
  func.func @transform_0(%arg0: i32) -> (i32, i32, i32) {
    %c0_i32 = arith.constant 0 : i32
    %c0_i32_0 = arith.constant 0 : i32
    %c0_i32_1 = arith.constant 0 : i32
    return %arg0, %c0_i32, %c0_i32_0 : i32, i32, i32
  }
  func.func @transform_1(%arg0: i32) -> (i32, i32, i32) {
    %c0_i32 = arith.constant 0 : i32
    %c0_i32_0 = arith.constant 0 : i32
    %c0_i32_1 = arith.constant 0 : i32
    return %arg0, %c0_i32, %c0_i32_0 : i32, i32, i32
  }
  func.func @transform_2(%arg0: i32) -> (i32, i32) {
    %c0_i32 = arith.constant 0 : i32
    %c0_i32_0 = arith.constant 0 : i32
    %c0_i32_1 = arith.constant 0 : i32
    return %c0_i32, %c0_i32_0 : i32, i32
  }
  func.func @transform_3(%arg0: i32) -> (i32, i32) {
    %c0_i32 = arith.constant 0 : i32
    %c0_i32_0 = arith.constant 0 : i32
    %c0_i32_1 = arith.constant 0 : i32
    return %c0_i32, %c0_i32_0 : i32, i32
  }
  func.func @transform_4(%arg0: i32) -> (i32, i32, i32) {
    %c0_i32 = arith.constant 0 : i32
    %c0_i32_0 = arith.constant 0 : i32
    %c0_i32_1 = arith.constant 0 : i32
    %c0_i32_2 = arith.constant 0 : i32
    return %c0_i32, %c0_i32_0, %c0_i32_1 : i32, i32, i32
  }
  func.func @transform_5(%arg0: i32) -> (i32, i32, i32) {
    %c0_i32 = arith.constant 0 : i32
    %c0_i32_0 = arith.constant 0 : i32
    %c0_i32_1 = arith.constant 0 : i32
    %c0_i32_2 = arith.constant 0 : i32
    return %c0_i32, %c0_i32_0, %c0_i32_1 : i32, i32, i32
  }
  func.func @transform_6(%arg0: i32) -> (i32, i32) {
    %c0_i32 = arith.constant 0 : i32
    %c0_i32_0 = arith.constant 0 : i32
    %c0_i32_1 = arith.constant 0 : i32
    return %c0_i32, %c0_i32_0 : i32, i32
  }
  func.func @transform_7(%arg0: i32) -> (i32, i32, i32) {
    %c0_i32 = arith.constant 0 : i32
    %c0_i32_0 = arith.constant 0 : i32
    %c0_i32_1 = arith.constant 0 : i32
    return %arg0, %c0_i32, %c0_i32_0 : i32, i32, i32
  }
}

</mosaic_0001>

<llo_original>
// kernel: forward.1
$region0: #{forward.1}
  #allocation0 [shape = 'u32[]', space=smem, size = 0x4, offset = 0x4, fixed_abs, tag = 'smem constant byte address 0x4 - core index']
  #allocation1 [shape = 'u32[144,128]{1,0:T(1,128)}', space=vmem, size = 0x12000, scoped, tag = 'internal scratch']
  %s0 = inlined_call_operand.vmem [shape: f32[4,8,32], index: 0, kind: input, shape index: {}]
  %s1 = inlined_call_operand.vmem [shape: f32[4,16,64], index: 1, kind: input, shape index: {}]
  %s2 = inlined_call_operand.vmem [shape: bf16[32,64], index: 2, kind: input, shape index: {}]
  %s3 = inlined_call_operand.vmem [shape: bf16[32,16], index: 3, kind: input, shape index: {}]
  %s4 = inlined_call_operand.vmem [shape: bf16[3,64,256], index: 4, kind: input, shape index: {}]
  %s5 = inlined_call_operand.vmem [shape: bf16[3,64,256], index: 5, kind: input, shape index: {}]
  %s6 = inlined_call_operand.vmem [shape: f32[1,256], index: 6, kind: input, shape index: {}]
  %s7 = inlined_call_operand.vmem [shape: f32[4,16,256], index: 7, kind: output, shape index: {}]
  %s8 = sld [smem:[#allocation0]]
  $region61: #{forward.1} parent=0
    _
  %s10 = ssub.s32 1, %s8
  %s11 = scalar_select 0, %s10, %s8
  loop: start=0, step=1, limit=4
  $region2: #{forward.1} parent=0 // loop_pre_header
    _
  $region3: #{forward.1} parent=0 // loop_header
    %s13 = sphi 0, %s17
    %p14 = scmp.ge.s32.totalorder %s13, 4
    %s23 = sphi 0, %s25
    %s26 = sphi 0, %s23
    %s27 = sphi 0, %s26
    %s43 = sphi 0, %s27
    %s49 = sphi 0, %s51
    %s52 = sphi 0, %s49
    %s53 = sphi 0, %s52
    %s69 = sphi 0, %s53
    %s73 = sphi 0, %s73
    %s75 = sphi 0, %s73
    %s76 = sphi 0, %s75
    %s90 = sphi 0, %s76
    %s94 = sphi 0, %s94
    %s96 = sphi 0, %s94
    %s97 = sphi 0, %s96
    %s111 = sphi 0, %s97
    %s115 = sphi 0, %s115
    %s117 = sphi 0, %s115
    %s118 = sphi 0, %s117
    %s132 = sphi 0, %s118
    %s136 = sphi 0, %s136
    %s138 = sphi 0, %s136
    %s139 = sphi 0, %s138
    %s153 = sphi 0, %s139
    %s157 = sphi 0, %s157
    %s159 = sphi 0, %s157
    %s160 = sphi 0, %s159
    %s174 = sphi 0, %s160
    %s180 = sphi 0, %s182
    %s183 = sphi 0, %s180
    %s184 = sphi 0, %s183
    %s200 = sphi 0, %s184
  $region4: #{forward.1} parent=0 // loop_header_branch
    %16 = sbr.rel (%p14) target = $region8
  $region5: #{forward.1} parent=0 // loop_body
    %s18 = ssub.s32 %s13, 1
    %s19 = ssub.s32 %s13, 2
    %s20 = sadd.s32 %s13, 1
    %s21 = ssub.s32 %s13, %s20
    %p22 = scmp.eq.s32.totalorder %s21, 0
    %s24 = sadd.s32 %s23, 1
    %s25 = scalar_select %p22, %s23, %s24
    %p28 = pneg %p22
    %p29 = scmp.eq.s32.totalorder %s13, 1
    %p30 = por %p28, %p29
    %p31 = scmp.ne.s32.totalorder %s23, %s26
    %p32 = scmp.eq.s32.totalorder %s13, 0
    %p33 = por %p31, %p32
    %p34 = scmp.ne.s32.totalorder %s23, %s26
    %p35 = scmp.eq.s32.totalorder %s18, 1
    %p36 = por %p34, %p35
    %p37 = scmp.ne.s32.totalorder %s26, %s27
    %p38 = scmp.eq.s32.totalorder %s18, 0
    %p39 = por %p37, %p38
    %p40 = scmp.ne.s32.totalorder %s26, %s27
    %p41 = scmp.eq.s32.totalorder %s19, 1
    %p42 = por %p40, %p41
    %p44 = scmp.ne.s32.totalorder %s27, %s43
    %p45 = scmp.eq.s32.totalorder %s19, 0
    %p46 = por %p44, %p45
    %s47 = ssub.s32 %s13, %s20
    %p48 = scmp.eq.s32.totalorder %s47, 0
    %s50 = sadd.s32 %s49, 1
    %s51 = scalar_select %p48, %s49, %s50
    %p54 = pneg %p48
    %p55 = scmp.eq.s32.totalorder %s13, 1
    %p56 = por %p54, %p55
    %p57 = scmp.ne.s32.totalorder %s49, %s52
    %p58 = scmp.eq.s32.totalorder %s13, 0
    %p59 = por %p57, %p58
    %p60 = scmp.ne.s32.totalorder %s49, %s52
    %p61 = scmp.eq.s32.totalorder %s18, 1
    %p62 = por %p60, %p61
    %p63 = scmp.ne.s32.totalorder %s52, %s53
    %p64 = scmp.eq.s32.totalorder %s18, 0
    %p65 = por %p63, %p64
    %p66 = scmp.ne.s32.totalorder %s52, %s53
    %p67 = scmp.eq.s32.totalorder %s19, 1
    %p68 = por %p66, %p67
    %p70 = scmp.ne.s32.totalorder %s53, %s69
    %p71 = scmp.eq.s32.totalorder %s19, 0
    %p72 = por %p70, %p71
    %s74 = sadd.s32 %s73, 1
    %p77 = scmp.eq.s32.totalorder %s13, 1
    %p78 = scmp.ne.s32.totalorder %s73, %s75
    %p79 = scmp.eq.s32.totalorder %s13, 0
    %p80 = por %p78, %p79
    %p81 = scmp.ne.s32.totalorder %s73, %s75
    %p82 = scmp.eq.s32.totalorder %s18, 1
    %p83 = por %p81, %p82
    %p84 = scmp.ne.s32.totalorder %s75, %s76
    %p85 = scmp.eq.s32.totalorder %s18, 0
    %p86 = por %p84, %p85
    %p87 = scmp.ne.s32.totalorder %s75, %s76
    %p88 = scmp.eq.s32.totalorder %s19, 1
    %p89 = por %p87, %p88
    %p91 = scmp.ne.s32.totalorder %s76, %s90
    %p92 = scmp.eq.s32.totalorder %s19, 0
    %p93 = por %p91, %p92
    %s95 = sadd.s32 %s94, 1
    %p98 = scmp.eq.s32.totalorder %s13, 1
    %p99 = scmp.ne.s32.totalorder %s94, %s96
    %p100 = scmp.eq.s32.totalorder %s13, 0
    %p101 = por %p99, %p100
    %p102 = scmp.ne.s32.totalorder %s94, %s96
    %p103 = scmp.eq.s32.totalorder %s18, 1
    %p104 = por %p102, %p103
    %p105 = scmp.ne.s32.totalorder %s96, %s97
    %p106 = scmp.eq.s32.totalorder %s18, 0
    %p107 = por %p105, %p106
    %p108 = scmp.ne.s32.totalorder %s96, %s97
    %p109 = scmp.eq.s32.totalorder %s19, 1
    %p110 = por %p108, %p109
    %p112 = scmp.ne.s32.totalorder %s97, %s111
    %p113 = scmp.eq.s32.totalorder %s19, 0
    %p114 = por %p112, %p113
    %s116 = sadd.s32 %s115, 1
    %p119 = scmp.eq.s32.totalorder %s13, 1
    %p120 = scmp.ne.s32.totalorder %s115, %s117
    %p121 = scmp.eq.s32.totalorder %s13, 0
    %p122 = por %p120, %p121
    %p123 = scmp.ne.s32.totalorder %s115, %s117
    %p124 = scmp.eq.s32.totalorder %s18, 1
    %p125 = por %p123, %p124
    %p126 = scmp.ne.s32.totalorder %s117, %s118
    %p127 = scmp.eq.s32.totalorder %s18, 0
    %p128 = por %p126, %p127
    %p129 = scmp.ne.s32.totalorder %s117, %s118
    %p130 = scmp.eq.s32.totalorder %s19, 1
    %p131 = por %p129, %p130
    %p133 = scmp.ne.s32.totalorder %s118, %s132
    %p134 = scmp.eq.s32.totalorder %s19, 0
    %p135 = por %p133, %p134
    %s137 = sadd.s32 %s136, 1
    %p140 = scmp.eq.s32.totalorder %s13, 1
    %p141 = scmp.ne.s32.totalorder %s136, %s138
    %p142 = scmp.eq.s32.totalorder %s13, 0
    %p143 = por %p141, %p142
    %p144 = scmp.ne.s32.totalorder %s136, %s138
    %p145 = scmp.eq.s32.totalorder %s18, 1
    %p146 = por %p144, %p145
    %p147 = scmp.ne.s32.totalorder %s138, %s139
    %p148 = scmp.eq.s32.totalorder %s18, 0
    %p149 = por %p147, %p148
    %p150 = scmp.ne.s32.totalorder %s138, %s139
    %p151 = scmp.eq.s32.totalorder %s19, 1
    %p152 = por %p150, %p151
    %p154 = scmp.ne.s32.totalorder %s139, %s153
    %p155 = scmp.eq.s32.totalorder %s19, 0
    %p156 = por %p154, %p155
    %s158 = sadd.s32 %s157, 1
    %p161 = scmp.eq.s32.totalorder %s13, 1
    %p162 = scmp.ne.s32.totalorder %s157, %s159
    %p163 = scmp.eq.s32.totalorder %s13, 0
    %p164 = por %p162, %p163
    %p165 = scmp.ne.s32.totalorder %s157, %s159
    %p166 = scmp.eq.s32.totalorder %s18, 1
    %p167 = por %p165, %p166
    %p168 = scmp.ne.s32.totalorder %s159, %s160
    %p169 = scmp.eq.s32.totalorder %s18, 0
    %p170 = por %p168, %p169
    %p171 = scmp.ne.s32.totalorder %s159, %s160
    %p172 = scmp.eq.s32.totalorder %s19, 1
    %p173 = por %p171, %p172
    %p175 = scmp.ne.s32.totalorder %s160, %s174
    %p176 = scmp.eq.s32.totalorder %s19, 0
    %p177 = por %p175, %p176
    %s178 = ssub.s32 %s13, %s20
    %p179 = scmp.eq.s32.totalorder %s178, 0
    %s181 = sadd.s32 %s180, 1
    %s182 = scalar_select %p179, %s180, %s181
    %p185 = pneg %p179
    %p186 = scmp.eq.s32.totalorder %s13, 1
    %p187 = por %p185, %p186
    %p188 = scmp.ne.s32.totalorder %s180, %s183
    %p189 = scmp.eq.s32.totalorder %s13, 0
    %p190 = por %p188, %p189
    %p191 = scmp.ne.s32.totalorder %s180, %s183
    %p192 = scmp.eq.s32.totalorder %s18, 1
    %p193 = por %p191, %p192
    %p194 = scmp.ne.s32.totalorder %s183, %s184
    %p195 = scmp.eq.s32.totalorder %s18, 0
    %p196 = por %p194, %p195
    %p197 = scmp.ne.s32.totalorder %s183, %s184
    %p198 = scmp.eq.s32.totalorder %s19, 1
    %p199 = por %p197, %p198
    %p201 = scmp.ne.s32.totalorder %s184, %s200
    %p202 = scmp.eq.s32.totalorder %s19, 0
    %p203 = por %p201, %p202
    %p204 = scmp.le.s32.totalorder 1, %s13
    %p205 = scmp.lt.s32.totalorder %s13, 3
    %p206 = pnand %p204, %p205
    %p207 = pneg %p206
    // Predicated region
    $region9: #{forward.1} parent=5 // pred_check
      _
    $region10: #{forward.1} parent=5 // pred_check_branch
      %209 = sbr.rel (%p206) target = $region12
    $region11: #{forward.1} parent=5 // pred_region
      %s210 = ssub.s32 %s13, 1
      // Predicated region
      $region13: #{forward.1} parent=11 // pred_check
        %p211 = pneg %p86
      $region14: #{forward.1} parent=11 // pred_check_branch
        %213 = sbr.rel (%p211) target = $region16
      $region15: #{forward.1} parent=11 // pred_region
        _
      $region16: #{forward.1} parent=11 // pred_fallthru
        _
      // Predicated region
      $region17: #{forward.1} parent=11 // pred_check
        %p214 = pneg %p107
      $region18: #{forward.1} parent=11 // pred_check_branch
        %216 = sbr.rel (%p214) target = $region20
      $region19: #{forward.1} parent=11 // pred_region
        _
      $region20: #{forward.1} parent=11 // pred_fallthru
        _
      // Predicated region
      $region21: #{forward.1} parent=11 // pred_check
        %p217 = pneg %p128
      $region22: #{forward.1} parent=11 // pred_check_branch
        %219 = sbr.rel (%p217) target = $region24
      $region23: #{forward.1} parent=11 // pred_region
        _
      $region24: #{forward.1} parent=11 // pred_fallthru
        _
      // Predicated region
      $region25: #{forward.1} parent=11 // pred_check
        %p220 = pneg %p149
      $region26: #{forward.1} parent=11 // pred_check_branch
        %222 = sbr.rel (%p220) target = $region28
      $region27: #{forward.1} parent=11 // pred_region
        _
      $region28: #{forward.1} parent=11 // pred_fallthru
        _
      // Predicated region
      $region29: #{forward.1} parent=11 // pred_check
        %p223 = pneg %p170
      $region30: #{forward.1} parent=11 // pred_check_branch
        %225 = sbr.rel (%p223) target = $region32
      $region31: #{forward.1} parent=11 // pred_region
        _
      $region32: #{forward.1} parent=11 // pred_fallthru
        _
    $region12: #{forward.1} parent=5 // pred_fallthru
      _
    %p226 = scmp.lt.s32.totalorder %s13, 2
    // Predicated region
    $region33: #{forward.1} parent=5 // pred_check
      %p227 = pneg %p226
    $region34: #{forward.1} parent=5 // pred_check_branch
      %229 = sbr.rel (%p227) target = $region36
    $region35: #{forward.1} parent=5 // pred_region
      // Predicated region
      $region37: #{forward.1} parent=35 // pred_check
        %p230 = pneg %p33
      $region38: #{forward.1} parent=35 // pred_check_branch
        %232 = sbr.rel (%p230) target = $region40
      $region39: #{forward.1} parent=35 // pred_region
        %s233 = smul.u32 2, %s13
        %p234 = scmp.lt.s32.totalorder %s233, 3
        %s235 = scalar_select %p234, %s233, 3
        %s236 = smul.addr %s235, 8
        %s237 = scalar_lea.vmem %s0, %s236
        %s238 = smul.u32 2, %s13
      $region40: #{forward.1} parent=35 // pred_fallthru
        _
      // Predicated region
      $region41: #{forward.1} parent=35 // pred_check
        %p239 = pneg %p59
      $region42: #{forward.1} parent=35 // pred_check_branch
        %241 = sbr.rel (%p239) target = $region44
      $region43: #{forward.1} parent=35 // pred_region
        %s242 = smul.u32 2, %s13
        %p243 = scmp.lt.s32.totalorder %s242, 3
        %s244 = scalar_select %p243, %s242, 3
        %s245 = smul.addr %s244, 2
        %s246 = smul.addr %s245, 8
        %s247 = scalar_lea.vmem %s1, %s246
        %s248 = smul.u32 2, %s13
      $region44: #{forward.1} parent=35 // pred_fallthru
        _
    $region36: #{forward.1} parent=5 // pred_fallthru
      _
    %p249 = scmp.le.s32.totalorder 1, %s13
    %p250 = scmp.lt.s32.totalorder %s13, 3
    %p251 = pnand %p249, %p250
    %p252 = pneg %p251
    // Predicated region
    $region45: #{forward.1} parent=5 // pred_check
      _
    $region46: #{forward.1} parent=5 // pred_check_branch
      %254 = sbr.rel (%p251) target = $region48
    $region47: #{forward.1} parent=5 // pred_region
      %s255 = ssub.s32 %s13, 1
      %s256 = smul.u32 2, %s18
      %p257 = scmp.lt.s32.totalorder %s256, 3
      %s258 = scalar_select %p257, %s256, 3
      %s259 = smul.addr %s258, 8
      %s260 = scalar_lea.vmem %s0, %s259
      %p261 = pneg %p39
      %p262 = pneg %p36
      %s263 = smul.u32 2, %s18
      %p264 = scmp.lt.s32.totalorder %s263, 3
      %s265 = scalar_select %p264, %s263, 3
      %s266 = smul.addr %s265, 2
      %s267 = smul.addr %s266, 8
      %s268 = scalar_lea.vmem %s1, %s267
      %p269 = pneg %p65
      %p270 = pneg %p62
      %p271 = pneg %p86
      %p272 = pneg %p83
      %p273 = pneg %p107
      %p274 = pneg %p104
      %p275 = pneg %p128
      %p276 = pneg %p125
      %p277 = pneg %p149
      %p278 = pneg %p146
      %p279 = pneg %p170
      %p280 = pneg %p167
      %p281 = pneg %p196
      %p282 = pneg %p193
      %s283 = smul.u32 2, %s18
      %p284 = scmp.lt.s32.totalorder %s283, 3
      %s285 = scalar_select %p284, %s283, 3
      %s286 = smul.addr %s285, 4
      %s287 = smul.addr %s286, 8
      %s288 = scalar_lea.vmem %s7, %s287
      %s289 = smul.u32 2, %s18
      %p290 = scmp.lt.s32.totalorder %s289, 3
      %s291 = scalar_select %p290, %s289, 3
      %s292 = smul.addr %s291, 8
      %s293 = scalar_lea.vmem %s0, %s292
      %s294 = smul.u32 2, %s18
      %s295 = smul.u32 2, %s18
      %p296 = scmp.lt.s32.totalorder %s295, 3
      %s297 = scalar_select %p296, %s295, 3
      %s298 = smul.addr %s297, 2
      %s299 = smul.addr %s298, 8
      %s300 = scalar_lea.vmem %s1, %s299
      %s301 = smul.u32 2, %s18
      %s302 = smul.u32 2, %s18
      %p303 = scmp.lt.s32.totalorder %s302, 3
      %s304 = scalar_select %p303, %s302, 3
      %s305 = smul.addr %s304, 4
      %s306 = smul.addr %s305, 8
      %s307 = scalar_lea.vmem %s7, %s306
      %s308 = smul.u32 2, %s18
      %v310 = vld [vmem:[%s293] sm:$0xff]
      %v311 = vld [vmem:[%s293 + $0x8] sm:$0xff]
      %v312 = vpack.c.bf16 %v311, %v310
      %v313 = vld [vmem:[%s2] sm:$0xf]
      %v314 = vld [vmem:[%s2 + $0x4] sm:$0xf]
      %v315 = vld [vmem:[%s2 + $0x8] sm:$0xf]
      %v316 = vld [vmem:[%s2 + $0xc] sm:$0xf]
      %v321 = vunpack.c.l.b16 %v313
      %v322 = vunpack.c.l.b16 %v314
      %v323 = vunpack.c.l.b16 %v315
      %v324 = vunpack.c.l.b16 %v316
      %v325 = vpack.c.b16 %v322, %v321
      %v326 = vpack.c.b16 %v324, %v323
      %vm329 = vcmask 261120
      %v331 = vsel %vm329, %v312, 0
      %333 = vmatprep.subr.bf16.mxu0 0
      %334 = vmatpush1.bf16.msra.mxu0 %v325
      %335 = vmatprep.subr.bf16.mxu0 0
      %336 = vmatpush1.bf16.msra.mxu0 %v326
      %337 = vmatprep.subr.bf16.mxu0 0
      %338 = vmatpush1.bf16.msra.mxu0 0
      %339 = vmatprep.subr.bf16.mxu0 0
      %340 = vmatpush1.bf16.msra.mxu0 0
      %341 = vmatprep.subr.bf16.mxu0 0
      %342 = vmatpush1.bf16.msra.mxu0 0
      %343 = vmatprep.subr.bf16.mxu0 0
      %344 = vmatpush1.bf16.msra.mxu0 0
      %345 = vmatprep.subr.bf16.mxu0 0
      %346 = vmatpush1.bf16.msra.mxu0 0
      %347 = vmatprep.subr.bf16.mxu0 0
      %348 = vmatpush1.bf16.msra.mxu0 0
      %349 = vmatprep.subr.bf16.mxu0 0
      %350 = vmatpush1.bf16.msra.mxu0 0
      %351 = vmatprep.subr.bf16.mxu0 0
      %352 = vmatpush1.bf16.msra.mxu0 0
      %353 = vmatprep.subr.bf16.mxu0 0
      %354 = vmatpush1.bf16.msra.mxu0 0
      %355 = vmatprep.subr.bf16.mxu0 0
      %356 = vmatpush1.bf16.msra.mxu0 0
      %357 = vmatprep.subr.bf16.mxu0 0
      %358 = vmatpush1.bf16.msra.mxu0 0
      %359 = vmatprep.subr.bf16.mxu0 0
      %360 = vmatpush1.bf16.msra.mxu0 0
      %361 = vmatprep.subr.bf16.mxu0 0
      %362 = vmatpush1.bf16.msra.mxu0 0
      %363 = vmatprep.subr.bf16.mxu0 0
      %364 = vmatpush1.bf16.msra.mxu0 0
      %365 = vmatprep.mubr.bf16.mxu0 0
      %366 = vmatmul.mubr.bf16.gmra.mrb[0].mxu0 %v331
      %v367 = vpop.f32.mrb[0].mxu0
      %v368 = vadd.f32 0.0, %v367
      %v369 = vpop.f32.mrb[0].mxu0
      %v370 = vpop.f32.mrb[0].mxu0
      %v371 = vadd.f32 0.0, %v370
      %v372 = vpop.f32.mrb[0].mxu0
      %373 = vdwg.mxu0
      %v374 = vld [vmem:[%s3] sm:$0xf]
      %v375 = vld [vmem:[%s3 + $0x4] sm:$0xf]
      %v376 = vld [vmem:[%s3 + $0x8] sm:$0xf]
      %v377 = vld [vmem:[%s3 + $0xc] sm:$0xf]
      %v378 = vpack.c.bf16 %v371, %v368
      %v383 = vunpack.c.l.b16 %v374
      %v384 = vunpack.c.l.b16 %v375
      %v385 = vunpack.c.l.b16 %v376
      %v386 = vunpack.c.l.b16 %v377
      %v387 = vpack.c.b16 %v384, %v383
      %v388 = vpack.c.b16 %v386, %v385
      %vm389 = vcmask 130048
      %v391 = vsel %vm389, %v387, 0
      %v394 = vsel %vm389, %v388, 0
      %396 = vmatprep.subr.bf16.mxu0 0
      %397 = vmatpush1.bf16.msra.mxu0 %v378
      %398 = vmatprep.subr.bf16.mxu0 0
      %399 = vmatpush1.bf16.msra.mxu0 0
      %400 = vmatprep.subr.bf16.mxu0 0
      %401 = vmatpush1.bf16.msra.mxu0 0
      %402 = vmatprep.subr.bf16.mxu0 0
      %403 = vmatpush1.bf16.msra.mxu0 0
      %404 = vmatprep.subr.bf16.mxu0 0
      %405 = vmatpush1.bf16.msra.mxu0 0
      %406 = vmatprep.subr.bf16.mxu0 0
      %407 = vmatpush1.bf16.msra.mxu0 0
      %408 = vmatprep.subr.bf16.mxu0 0
      %409 = vmatpush1.bf16.msra.mxu0 0
      %410 = vmatprep.subr.bf16.mxu0 0
      %411 = vmatpush1.bf16.msra.mxu0 0
      %412 = vmatprep.subr.bf16.mxu0 0
      %413 = vmatpush1.bf16.msra.mxu0 0
      %414 = vmatprep.subr.bf16.mxu0 0
      %415 = vmatpush1.bf16.msra.mxu0 0
      %416 = vmatprep.subr.bf16.mxu0 0
      %417 = vmatpush1.bf16.msra.mxu0 0
      %418 = vmatprep.subr.bf16.mxu0 0
      %419 = vmatpush1.bf16.msra.mxu0 0
      %420 = vmatprep.subr.bf16.mxu0 0
      %421 = vmatpush1.bf16.msra.mxu0 0
      %422 = vmatprep.subr.bf16.mxu0 0
      %423 = vmatpush1.bf16.msra.mxu0 0
      %424 = vmatprep.subr.bf16.mxu0 0
      %425 = vmatpush1.bf16.msra.mxu0 0
      %426 = vmatprep.subr.bf16.mxu0 0
      %427 = vmatpush1.bf16.msra.mxu0 0
      %428 = vmatprep.mubr.bf16.mxu0 0
      %429 = vmatmul.mubr.bf16.gmra.mrb[0].mxu0 %v391
      %v430 = vpop.f32.mrb[0].mxu0
      %v431 = vadd.f32 0.0, %v430
      %v432 = vpop.f32.mrb[0].mxu0
      %v433 = vpop.f32.mrb[0].mxu0
      %v434 = vadd.f32 0.0, %v433
      %v435 = vpop.f32.mrb[0].mxu0
      %436 = vmatprep.mubr.bf16.mxu0 0
      %437 = vmatmul.mubr.bf16.gmra.mrb[0].mxu0 %v394
      %v438 = vpop.f32.mrb[0].mxu0
      %v439 = vadd.f32 0.0, %v438
      %v440 = vpop.f32.mrb[0].mxu0
      %v441 = vpop.f32.mrb[0].mxu0
      %v442 = vadd.f32 0.0, %v441
      %v443 = vpop.f32.mrb[0].mxu0
      %444 = vdwg.mxu0
      %v445 = vld [vmem:[%s300] sm:$0xff]
      %v446 = vld [vmem:[%s300 + $0x8] sm:$0xff]
      %v447 = vld [vmem:[%s300 + $0x10] sm:$0xff]
      %v448 = vld [vmem:[%s300 + $0x18] sm:$0xff]
      %v449 = vlaneseq
      %v450 = vshrl.u32 %v449, 7
      %v451 = vadd.s32 %v450, 8
      %v452 = vadd.s32 %v450, 16
      %v453 = vadd.s32 %v450, 24
      %vm454 = vcmp.lt.s32.totalorder %v450, 0
      %v455 = vsub.s32 0, %v450
      %v456 = vsel %vm454, %v455, %v450
      %v457 = vshrl.u32 %v456, 4
      %v458 = vand.u32 %v456, 15
      %v459 = vsub.s32 0, %v458
      %v460 = vsel %vm454, %v459, %v458
      %vm461 = vcmp.lt.s32.totalorder %v451, 0
      %v462 = vsub.s32 0, %v451
      %v463 = vsel %vm461, %v462, %v451
      %v464 = vshrl.u32 %v463, 4
      %v465 = vand.u32 %v463, 15
      %v466 = vsub.s32 0, %v465
      %v467 = vsel %vm461, %v466, %v465
      %vm468 = vcmp.lt.s32.totalorder %v452, 0
      %v469 = vsub.s32 0, %v452
      %v470 = vsel %vm468, %v469, %v452
      %v471 = vshrl.u32 %v470, 4
      %v472 = vand.u32 %v470, 15
      %v473 = vsub.s32 0, %v472
      %v474 = vsel %vm468, %v473, %v472
      %vm475 = vcmp.lt.s32.totalorder %v453, 0
      %v476 = vsub.s32 0, %v453
      %v477 = vsel %vm475, %v476, %v453
      %v478 = vshrl.u32 %v477, 4
      %v479 = vand.u32 %v477, 15
      %v480 = vsub.s32 0, %v479
      %v481 = vsel %vm475, %v480, %v479
      %vm482 = vcmp.ne.s32.totalorder %v460, 0
      %vm483 = vcmp.ne.s32.totalorder %v467, 0
      %vm484 = vcmp.ne.s32.totalorder %v474, 0
      %vm485 = vcmp.ne.s32.totalorder %v481, 0
      %vm486 = vcmp.lt.s32.totalorder %v460, 0
      %vm487 = vcmp.lt.s32.totalorder %v467, 0
      %vm488 = vcmp.lt.s32.totalorder %v474, 0
      %vm489 = vcmp.lt.s32.totalorder %v481, 0
      %vm490 = vmand %vm486, %vm482
      %vm491 = vmand %vm487, %vm483
      %vm492 = vmand %vm488, %vm484
      %vm493 = vmand %vm489, %vm485
      %v494 = vadd.s32 %v460, 16
      %v495 = vadd.s32 %v467, 16
      %v496 = vadd.s32 %v474, 16
      %v497 = vadd.s32 %v481, 16
      %v498 = vsel %vm490, %v494, %v460
      %v499 = vsel %vm491, %v495, %v467
      %v500 = vsel %vm492, %v496, %v474
      %v501 = vsel %vm493, %v497, %v481
      %vm502 = vcmp.ne.s32.totalorder %v498, 0
      %vm503 = vcmp.ne.s32.totalorder %v499, 0
      %vm504 = vcmp.ne.s32.totalorder %v500, 0
      %vm505 = vcmp.ne.s32.totalorder %v501, 0
      %vm506 = vcmp.ne.s32.totalorder %v498, 15
      %vm507 = vcmp.ne.s32.totalorder %v499, 15
      %vm508 = vcmp.ne.s32.totalorder %v500, 15
      %vm509 = vcmp.ne.s32.totalorder %v501, 15
      %v510 = vrot.slane %v431, 7
      %v511 = vrot.slane %v434, 7
      %v512 = vrot.slane %v439, 7
      %v513 = vrot.slane %v442, 7
      %vm514 = vcmp.lt.s32.totalorder %v450, 1
      %v515 = vsel %vm514, %v512, %v513
      %v516 = vsel %vm514, %v511, %v512
      %v517 = vsel %vm514, %v510, %v511
      %v518 = vsel %vm514, %v513, %v510
      %v519 = vsel %vm502, 1, 0
      %v520 = vsel %vm503, 1, 0
      %v521 = vsel %vm504, 1, 0
      %v522 = vsel %vm505, 1, 0
      %vm523 = vcmp.eq.s32.totalorder %v519, 1
      %vm524 = vcmp.eq.s32.totalorder %v520, 1
      %vm525 = vcmp.eq.s32.totalorder %v521, 1
      %vm526 = vcmp.eq.s32.totalorder %v522, 1
      %v527 = vsel %vm523, %v518, 0.0
      %v528 = vsel %vm524, %v517, 0.0
      %v529 = vsel %vm525, %v516, 0.0
      %v530 = vsel %vm526, %v515, 0.0
      %v531 = vpack.c.bf16 %v528, %v527
      %v532 = vpack.c.bf16 %v530, %v529
      %v533 = vld [vmem:[%s4] sm:$0xff]
      %v534 = vld [vmem:[%s4 + $0x8] sm:$0xff]
      %v535 = vld [vmem:[%s4 + $0x10] sm:$0xff]
      %v536 = vld [vmem:[%s4 + $0x18] sm:$0xff]
      %v537 = vld [vmem:[%s4 + $0x20] sm:$0xff]
      %v538 = vld [vmem:[%s4 + $0x28] sm:$0xff]
      %v539 = vld [vmem:[%s4 + $0x30] sm:$0xff]
      %v540 = vld [vmem:[%s4 + $0x38] sm:$0xff]
      %v541 = vrot.slane %v445, 7
      %v542 = vrot.slane %v446, 7
      %v543 = vrot.slane %v447, 7
      %v544 = vrot.slane %v448, 7
      %v545 = vsel %vm514, %v543, %v544
      %v546 = vsel %vm514, %v542, %v543
      %v547 = vsel %vm514, %v541, %v542
      %v548 = vsel %vm514, %v544, %v541
      %v549 = vsel %vm523, %v548, 0.0
      %v550 = vsel %vm524, %v547, 0.0
      %v551 = vsel %vm525, %v546, 0.0
      %v552 = vsel %vm526, %v545, 0.0
      %v553 = vpack.c.bf16 %v550, %v549
      %v554 = vpack.c.bf16 %v552, %v551
      %v555 = vld [vmem:[%s5] sm:$0xff]
      %v556 = vld [vmem:[%s5 + $0x8] sm:$0xff]
      %v557 = vld [vmem:[%s5 + $0x10] sm:$0xff]
      %v558 = vld [vmem:[%s5 + $0x18] sm:$0xff]
      %v559 = vld [vmem:[%s5 + $0x20] sm:$0xff]
      %v560 = vld [vmem:[%s5 + $0x28] sm:$0xff]
      %v561 = vld [vmem:[%s5 + $0x30] sm:$0xff]
      %v562 = vld [vmem:[%s5 + $0x38] sm:$0xff]
      %v571 = vunpack.c.l.b16 %v555
      %v572 = vunpack.c.h.b16 %v555
      %v573 = vunpack.c.l.b16 %v556
      %v574 = vunpack.c.h.b16 %v556
      %v575 = vunpack.c.l.b16 %v557
      %v576 = vunpack.c.h.b16 %v557
      %v577 = vunpack.c.l.b16 %v558
      %v578 = vunpack.c.h.b16 %v558
      %v579 = vunpack.c.l.b16 %v559
      %v580 = vunpack.c.h.b16 %v559
      %v581 = vunpack.c.l.b16 %v560
      %v582 = vunpack.c.h.b16 %v560
      %v583 = vunpack.c.l.b16 %v561
      %v584 = vunpack.c.h.b16 %v561
      %v585 = vunpack.c.l.b16 %v562
      %v586 = vunpack.c.h.b16 %v562
      %v587 = vpack.c.b16 %v573, %v571
      %v588 = vpack.c.b16 %v574, %v572
      %v589 = vpack.c.b16 %v577, %v575
      %v590 = vpack.c.b16 %v578, %v576
      %v591 = vpack.c.b16 %v581, %v579
      %v592 = vpack.c.b16 %v582, %v580
      %v593 = vpack.c.b16 %v585, %v583
      %v594 = vpack.c.b16 %v586, %v584
      %vm603 = vcmask 523264
      %v605 = vsel %vm603, %v553, 0
      %v608 = vsel %vm603, %v554, 0
      %610 = vmatprep.subr.bf16.mxu0 %v588
      %611 = vmatpush1.bf16.msra.mxu0 %v587
      %612 = vmatprep.subr.bf16.mxu0 %v590
      %613 = vmatpush1.bf16.msra.mxu0 %v589
      %614 = vmatprep.subr.bf16.mxu0 %v592
      %615 = vmatpush1.bf16.msra.mxu0 %v591
      %616 = vmatprep.subr.bf16.mxu0 %v594
      %617 = vmatpush1.bf16.msra.mxu0 %v593
      %618 = vmatprep.subr.bf16.mxu0 0
      %619 = vmatpush1.bf16.msra.mxu0 0
      %620 = vmatprep.subr.bf16.mxu0 0
      %621 = vmatpush1.bf16.msra.mxu0 0
      %622 = vmatprep.subr.bf16.mxu0 0
      %623 = vmatpush1.bf16.msra.mxu0 0
      %624 = vmatprep.subr.bf16.mxu0 0
      %625 = vmatpush1.bf16.msra.mxu0 0
      %626 = vmatprep.subr.bf16.mxu0 0
      %627 = vmatpush1.bf16.msra.mxu0 0
      %628 = vmatprep.subr.bf16.mxu0 0
      %629 = vmatpush1.bf16.msra.mxu0 0
      %630 = vmatprep.subr.bf16.mxu0 0
      %631 = vmatpush1.bf16.msra.mxu0 0
      %632 = vmatprep.subr.bf16.mxu0 0
      %633 = vmatpush1.bf16.msra.mxu0 0
      %634 = vmatprep.subr.bf16.mxu0 0
      %635 = vmatpush1.bf16.msra.mxu0 0
      %636 = vmatprep.subr.bf16.mxu0 0
      %637 = vmatpush1.bf16.msra.mxu0 0
      %638 = vmatprep.subr.bf16.mxu0 0
      %639 = vmatpush1.bf16.msra.mxu0 0
      %640 = vmatprep.subr.bf16.mxu0 0
      %641 = vmatpush1.bf16.msra.mxu0 0
      %642 = vmatprep.mubr.bf16.mxu0 0
      %643 = vmatmul.mubr.bf16.gmra.mrb[0].mxu0 %v605
      %v644 = vpop.f32.mrb[0].mxu0
      %v645 = vadd.f32 0.0, %v644
      %v646 = vpop.f32.mrb[0].mxu0
      %v647 = vadd.f32 0.0, %v646
      %v648 = vpop.f32.mrb[0].mxu0
      %v649 = vadd.f32 0.0, %v648
      %v650 = vpop.f32.mrb[0].mxu0
      %v651 = vadd.f32 0.0, %v650
      %652 = vmatprep.mubr.bf16.mxu0 0
      %653 = vmatmul.mubr.bf16.gmra.mrb[0].mxu0 %v608
      %v654 = vpop.f32.mrb[0].mxu0
      %v655 = vadd.f32 0.0, %v654
      %v656 = vpop.f32.mrb[0].mxu0
      %v657 = vadd.f32 0.0, %v656
      %v658 = vpop.f32.mrb[0].mxu0
      %v659 = vadd.f32 0.0, %v658
      %v660 = vpop.f32.mrb[0].mxu0
      %v661 = vadd.f32 0.0, %v660
      %662 = vdwg.mxu0
      %v671 = vunpack.c.l.b16 %v533
      %v672 = vunpack.c.h.b16 %v533
      %v673 = vunpack.c.l.b16 %v534
      %v674 = vunpack.c.h.b16 %v534
      %v675 = vunpack.c.l.b16 %v535
      %v676 = vunpack.c.h.b16 %v535
      %v677 = vunpack.c.l.b16 %v536
      %v678 = vunpack.c.h.b16 %v536
      %v679 = vunpack.c.l.b16 %v537
      %v680 = vunpack.c.h.b16 %v537
      %v681 = vunpack.c.l.b16 %v538
      %v682 = vunpack.c.h.b16 %v538
      %v683 = vunpack.c.l.b16 %v539
      %v684 = vunpack.c.h.b16 %v539
      %v685 = vunpack.c.l.b16 %v540
      %v686 = vunpack.c.h.b16 %v540
      %v687 = vpack.c.b16 %v673, %v671
      %v688 = vpack.c.b16 %v674, %v672
      %v689 = vpack.c.b16 %v677, %v675
      %v690 = vpack.c.b16 %v678, %v676
      %v691 = vpack.c.b16 %v681, %v679
      %v692 = vpack.c.b16 %v682, %v680
      %v693 = vpack.c.b16 %v685, %v683
      %v694 = vpack.c.b16 %v686, %v684
      %v704 = vsel %vm603, %v531, 0
      %v707 = vsel %vm603, %v532, 0
      %709 = vmatprep.subr.bf16.mxu0 %v688
      %710 = vmatpush1.bf16.msra.mxu0 %v687
      %711 = vmatprep.subr.bf16.mxu0 %v690
      %712 = vmatpush1.bf16.msra.mxu0 %v689
      %713 = vmatprep.subr.bf16.mxu0 %v692
      %714 = vmatpush1.bf16.msra.mxu0 %v691
      %715 = vmatprep.subr.bf16.mxu0 %v694
      %716 = vmatpush1.bf16.msra.mxu0 %v693
      %717 = vmatprep.subr.bf16.mxu0 0
      %718 = vmatpush1.bf16.msra.mxu0 0
      %719 = vmatprep.subr.bf16.mxu0 0
      %720 = vmatpush1.bf16.msra.mxu0 0
      %721 = vmatprep.subr.bf16.mxu0 0
      %722 = vmatpush1.bf16.msra.mxu0 0
      %723 = vmatprep.subr.bf16.mxu0 0
      %724 = vmatpush1.bf16.msra.mxu0 0
      %725 = vmatprep.subr.bf16.mxu0 0
      %726 = vmatpush1.bf16.msra.mxu0 0
      %727 = vmatprep.subr.bf16.mxu0 0
      %728 = vmatpush1.bf16.msra.mxu0 0
      %729 = vmatprep.subr.bf16.mxu0 0
      %730 = vmatpush1.bf16.msra.mxu0 0
      %731 = vmatprep.subr.bf16.mxu0 0
      %732 = vmatpush1.bf16.msra.mxu0 0
      %733 = vmatprep.subr.bf16.mxu0 0
      %734 = vmatpush1.bf16.msra.mxu0 0
      %735 = vmatprep.subr.bf16.mxu0 0
      %736 = vmatpush1.bf16.msra.mxu0 0
      %737 = vmatprep.subr.bf16.mxu0 0
      %738 = vmatpush1.bf16.msra.mxu0 0
      %739 = vmatprep.subr.bf16.mxu0 0
      %740 = vmatpush1.bf16.msra.mxu0 0
      %741 = vmatprep.mubr.bf16.mxu0 0
      %742 = vmatmul.mubr.bf16.gmra.mrb[0].mxu0 %v704
      %v743 = vpop.f32.mrb[0].mxu0
      %v744 = vadd.f32 %v645, %v743
      %v745 = vpop.f32.mrb[0].mxu0
      %v746 = vadd.f32 %v647, %v745
      %v747 = vpop.f32.mrb[0].mxu0
      %v748 = vadd.f32 %v649, %v747
      %v749 = vpop.f32.mrb[0].mxu0
      %v750 = vadd.f32 %v651, %v749
      %751 = vmatprep.mubr.bf16.mxu0 0
      %752 = vmatmul.mubr.bf16.gmra.mrb[0].mxu0 %v707
      %v753 = vpop.f32.mrb[0].mxu0
      %v754 = vadd.f32 %v655, %v753
      %v755 = vpop.f32.mrb[0].mxu0
      %v756 = vadd.f32 %v657, %v755
      %v757 = vpop.f32.mrb[0].mxu0
      %v758 = vadd.f32 %v659, %v757
      %v759 = vpop.f32.mrb[0].mxu0
      %v760 = vadd.f32 %v661, %v759
      %761 = vdwg.mxu0
      %v762 = vpack.c.bf16 %v434, %v431
      %v763 = vpack.c.bf16 %v442, %v439
      %s764 = scalar_lea.vmem %s4, 64
      %v765 = vld [vmem:[%s764] sm:$0xff]
      %v766 = vld [vmem:[%s764 + $0x8] sm:$0xff]
      %v767 = vld [vmem:[%s764 + $0x10] sm:$0xff]
      %v768 = vld [vmem:[%s764 + $0x18] sm:$0xff]
      %v769 = vld [vmem:[%s764 + $0x20] sm:$0xff]
      %v770 = vld [vmem:[%s764 + $0x28] sm:$0xff]
      %v771 = vld [vmem:[%s764 + $0x30] sm:$0xff]
      %v772 = vld [vmem:[%s764 + $0x38] sm:$0xff]
      %v773 = vpack.c.bf16 %v446, %v445
      %v774 = vpack.c.bf16 %v448, %v447
      %s775 = scalar_lea.vmem %s5, 64
      %v776 = vld [vmem:[%s775] sm:$0xff]
      %v777 = vld [vmem:[%s775 + $0x8] sm:$0xff]
      %v778 = vld [vmem:[%s775 + $0x10] sm:$0xff]
      %v779 = vld [vmem:[%s775 + $0x18] sm:$0xff]
      %v780 = vld [vmem:[%s775 + $0x20] sm:$0xff]
      %v781 = vld [vmem:[%s775 + $0x28] sm:$0xff]
      %v782 = vld [vmem:[%s775 + $0x30] sm:$0xff]
      %v783 = vld [vmem:[%s775 + $0x38] sm:$0xff]
      %v792 = vunpack.c.l.b16 %v776
      %v793 = vunpack.c.h.b16 %v776
      %v794 = vunpack.c.l.b16 %v777
      %v795 = vunpack.c.h.b16 %v777
      %v796 = vunpack.c.l.b16 %v778
      %v797 = vunpack.c.h.b16 %v778
      %v798 = vunpack.c.l.b16 %v779
      %v799 = vunpack.c.h.b16 %v779
      %v800 = vunpack.c.l.b16 %v780
      %v801 = vunpack.c.h.b16 %v780
      %v802 = vunpack.c.l.b16 %v781
      %v803 = vunpack.c.h.b16 %v781
      %v804 = vunpack.c.l.b16 %v782
      %v805 = vunpack.c.h.b16 %v782
      %v806 = vunpack.c.l.b16 %v783
      %v807 = vunpack.c.h.b16 %v783
      %v808 = vpack.c.b16 %v794, %v792
      %v809 = vpack.c.b16 %v795, %v793
      %v810 = vpack.c.b16 %v798, %v796
      %v811 = vpack.c.b16 %v799, %v797
      %v812 = vpack.c.b16 %v802, %v800
      %v813 = vpack.c.b16 %v803, %v801
      %v814 = vpack.c.b16 %v806, %v804
      %v815 = vpack.c.b16 %v807, %v805
      %v825 = vsel %vm603, %v773, 0
      %v828 = vsel %vm603, %v774, 0
      %830 = vmatprep.subr.bf16.mxu0 %v809
      %831 = vmatpush1.bf16.msra.mxu0 %v808
      %832 = vmatprep.subr.bf16.mxu0 %v811
      %833 = vmatpush1.bf16.msra.mxu0 %v810
      %834 = vmatprep.subr.bf16.mxu0 %v813
      %835 = vmatpush1.bf16.msra.mxu0 %v812
      %836 = vmatprep.subr.bf16.mxu0 %v815
      %837 = vmatpush1.bf16.msra.mxu0 %v814
      %838 = vmatprep.subr.bf16.mxu0 0
      %839 = vmatpush1.bf16.msra.mxu0 0
      %840 = vmatprep.subr.bf16.mxu0 0
      %841 = vmatpush1.bf16.msra.mxu0 0
      %842 = vmatprep.subr.bf16.mxu0 0
      %843 = vmatpush1.bf16.msra.mxu0 0
      %844 = vmatprep.subr.bf16.mxu0 0
      %845 = vmatpush1.bf16.msra.mxu0 0
      %846 = vmatprep.subr.bf16.mxu0 0
      %847 = vmatpush1.bf16.msra.mxu0 0
      %848 = vmatprep.subr.bf16.mxu0 0
      %849 = vmatpush1.bf16.msra.mxu0 0
      %850 = vmatprep.subr.bf16.mxu0 0
      %851 = vmatpush1.bf16.msra.mxu0 0
      %852 = vmatprep.subr.bf16.mxu0 0
      %853 = vmatpush1.bf16.msra.mxu0 0
      %854 = vmatprep.subr.bf16.mxu0 0
      %855 = vmatpush1.bf16.msra.mxu0 0
      %856 = vmatprep.subr.bf16.mxu0 0
      %857 = vmatpush1.bf16.msra.mxu0 0
      %858 = vmatprep.subr.bf16.mxu0 0
      %859 = vmatpush1.bf16.msra.mxu0 0
      %860 = vmatprep.subr.bf16.mxu0 0
      %861 = vmatpush1.bf16.msra.mxu0 0
      %862 = vmatprep.mubr.bf16.mxu0 0
      %863 = vmatmul.mubr.bf16.gmra.mrb[0].mxu0 %v825
      %v864 = vpop.f32.mrb[0].mxu0
      %v865 = vadd.f32 0.0, %v864
      %v866 = vpop.f32.mrb[0].mxu0
      %v867 = vadd.f32 0.0, %v866
      %v868 = vpop.f32.mrb[0].mxu0
      %v869 = vadd.f32 0.0, %v868
      %v870 = vpop.f32.mrb[0].mxu0
      %v871 = vadd.f32 0.0, %v870
      %872 = vmatprep.mubr.bf16.mxu0 0
      %873 = vmatmul.mubr.bf16.gmra.mrb[0].mxu0 %v828
      %v874 = vpop.f32.mrb[0].mxu0
      %v875 = vadd.f32 0.0, %v874
      %v876 = vpop.f32.mrb[0].mxu0
      %v877 = vadd.f32 0.0, %v876
      %v878 = vpop.f32.mrb[0].mxu0
      %v879 = vadd.f32 0.0, %v878
      %v880 = vpop.f32.mrb[0].mxu0
      %v881 = vadd.f32 0.0, %v880
      %882 = vdwg.mxu0
      %v891 = vunpack.c.l.b16 %v765
      %v892 = vunpack.c.h.b16 %v765
      %v893 = vunpack.c.l.b16 %v766
      %v894 = vunpack.c.h.b16 %v766
      %v895 = vunpack.c.l.b16 %v767
      %v896 = vunpack.c.h.b16 %v767
      %v897 = vunpack.c.l.b16 %v768
      %v898 = vunpack.c.h.b16 %v768
      %v899 = vunpack.c.l.b16 %v769
      %v900 = vunpack.c.h.b16 %v769
      %v901 = vunpack.c.l.b16 %v770
      %v902 = vunpack.c.h.b16 %v770
      %v903 = vunpack.c.l.b16 %v771
      %v904 = vunpack.c.h.b16 %v771
      %v905 = vunpack.c.l.b16 %v772
      %v906 = vunpack.c.h.b16 %v772
      %v907 = vpack.c.b16 %v893, %v891
      %v908 = vpack.c.b16 %v894, %v892
      %v909 = vpack.c.b16 %v897, %v895
      %v910 = vpack.c.b16 %v898, %v896
      %v911 = vpack.c.b16 %v901, %v899
      %v912 = vpack.c.b16 %v902, %v900
      %v913 = vpack.c.b16 %v905, %v903
      %v914 = vpack.c.b16 %v906, %v904
      %v924 = vsel %vm603, %v762, 0
      %v927 = vsel %vm603, %v763, 0
      %929 = vmatprep.subr.bf16.mxu0 %v908
      %930 = vmatpush1.bf16.msra.mxu0 %v907
      %931 = vmatprep.subr.bf16.mxu0 %v910
      %932 = vmatpush1.bf16.msra.mxu0 %v909
      %933 = vmatprep.subr.bf16.mxu0 %v912
      %934 = vmatpush1.bf16.msra.mxu0 %v911
      %935 = vmatprep.subr.bf16.mxu0 %v914
      %936 = vmatpush1.bf16.msra.mxu0 %v913
      %937 = vmatprep.subr.bf16.mxu0 0
      %938 = vmatpush1.bf16.msra.mxu0 0
      %939 = vmatprep.subr.bf16.mxu0 0
      %940 = vmatpush1.bf16.msra.mxu0 0
      %941 = vmatprep.subr.bf16.mxu0 0
      %942 = vmatpush1.bf16.msra.mxu0 0
      %943 = vmatprep.subr.bf16.mxu0 0
      %944 = vmatpush1.bf16.msra.mxu0 0
      %945 = vmatprep.subr.bf16.mxu0 0
      %946 = vmatpush1.bf16.msra.mxu0 0
      %947 = vmatprep.subr.bf16.mxu0 0
      %948 = vmatpush1.bf16.msra.mxu0 0
      %949 = vmatprep.subr.bf16.mxu0 0
      %950 = vmatpush1.bf16.msra.mxu0 0
      %951 = vmatprep.subr.bf16.mxu0 0
      %952 = vmatpush1.bf16.msra.mxu0 0
      %953 = vmatprep.subr.bf16.mxu0 0
      %954 = vmatpush1.bf16.msra.mxu0 0
      %955 = vmatprep.subr.bf16.mxu0 0
      %956 = vmatpush1.bf16.msra.mxu0 0
      %957 = vmatprep.subr.bf16.mxu0 0
      %958 = vmatpush1.bf16.msra.mxu0 0
      %959 = vmatprep.subr.bf16.mxu0 0
      %960 = vmatpush1.bf16.msra.mxu0 0
      %961 = vmatprep.mubr.bf16.mxu0 0
      %962 = vmatmul.mubr.bf16.gmra.mrb[0].mxu0 %v924
      %v963 = vpop.f32.mrb[0].mxu0
      %v964 = vadd.f32 %v865, %v963
      %v965 = vpop.f32.mrb[0].mxu0
      %v966 = vadd.f32 %v867, %v965
      %v967 = vpop.f32.mrb[0].mxu0
      %v968 = vadd.f32 %v869, %v967
      %v969 = vpop.f32.mrb[0].mxu0
      %v970 = vadd.f32 %v871, %v969
      %971 = vmatprep.mubr.bf16.mxu0 0
      %972 = vmatmul.mubr.bf16.gmra.mrb[0].mxu0 %v927
      %v973 = vpop.f32.mrb[0].mxu0
      %v974 = vadd.f32 %v875, %v973
      %v975 = vpop.f32.mrb[0].mxu0
      %v976 = vadd.f32 %v877, %v975
      %v977 = vpop.f32.mrb[0].mxu0
      %v978 = vadd.f32 %v879, %v977
      %v979 = vpop.f32.mrb[0].mxu0
      %v980 = vadd.f32 %v881, %v979
      %981 = vdwg.mxu0
      %v982 = vadd.f32 %v744, %v964
      %v983 = vadd.f32 %v746, %v966
      %v984 = vadd.f32 %v748, %v968
      %v985 = vadd.f32 %v750, %v970
      %v986 = vadd.f32 %v754, %v974
      %v987 = vadd.f32 %v756, %v976
      %v988 = vadd.f32 %v758, %v978
      %v989 = vadd.f32 %v760, %v980
      %v990 = vrot.slane %v431, 1
      %v991 = vrot.slane %v434, 1
      %v992 = vrot.slane %v439, 1
      %v993 = vrot.slane %v442, 1
      %vm994 = vcmp.lt.s32.totalorder %v450, 7
      %v995 = vsel %vm994, %v992, %v993
      %v996 = vsel %vm994, %v991, %v992
      %v997 = vsel %vm994, %v990, %v991
      %v998 = vsel %vm994, %v993, %v990
      %v999 = vsel %vm506, 1, 0
      %v1000 = vsel %vm507, 1, 0
      %v1001 = vsel %vm508, 1, 0
      %v1002 = vsel %vm509, 1, 0
      %vm1003 = vcmp.eq.s32.totalorder %v999, 1
      %vm1004 = vcmp.eq.s32.totalorder %v1000, 1
      %vm1005 = vcmp.eq.s32.totalorder %v1001, 1
      %vm1006 = vcmp.eq.s32.totalorder %v1002, 1
      %v1007 = vsel %vm1003, %v997, 0.0
      %v1008 = vsel %vm1004, %v996, 0.0
      %v1009 = vsel %vm1005, %v995, 0.0
      %v1010 = vsel %vm1006, %v998, 0.0
      %v1011 = vpack.c.bf16 %v1008, %v1007
      %v1012 = vpack.c.bf16 %v1010, %v1009
      %s1013 = scalar_lea.vmem %s4, 128
      %v1014 = vld [vmem:[%s1013] sm:$0xff]
      %v1015 = vld [vmem:[%s1013 + $0x8] sm:$0xff]
      %v1016 = vld [vmem:[%s1013 + $0x10] sm:$0xff]
      %v1017 = vld [vmem:[%s1013 + $0x18] sm:$0xff]
      %v1018 = vld [vmem:[%s1013 + $0x20] sm:$0xff]
      %v1019 = vld [vmem:[%s1013 + $0x28] sm:$0xff]
      %v1020 = vld [vmem:[%s1013 + $0x30] sm:$0xff]
      %v1021 = vld [vmem:[%s1013 + $0x38] sm:$0xff]
      %v1022 = vrot.slane %v445, 1
      %v1023 = vrot.slane %v446, 1
      %v1024 = vrot.slane %v447, 1
      %v1025 = vrot.slane %v448, 1
      %v1026 = vsel %vm994, %v1024, %v1025
      %v1027 = vsel %vm994, %v1023, %v1024
      %v1028 = vsel %vm994, %v1022, %v1023
      %v1029 = vsel %vm994, %v1025, %v1022
      %v1030 = vsel %vm1003, %v1028, 0.0
      %v1031 = vsel %vm1004, %v1027, 0.0
      %v1032 = vsel %vm1005, %v1026, 0.0
      %v1033 = vsel %vm1006, %v1029, 0.0
      %v1034 = vpack.c.bf16 %v1031, %v1030
      %v1035 = vpack.c.bf16 %v1033, %v1032
      %s1036 = scalar_lea.vmem %s5, 128
      %v1037 = vld [vmem:[%s1036] sm:$0xff]
      %v1038 = vld [vmem:[%s1036 + $0x8] sm:$0xff]
      %v1039 = vld [vmem:[%s1036 + $0x10] sm:$0xff]
      %v1040 = vld [vmem:[%s1036 + $0x18] sm:$0xff]
      %v1041 = vld [vmem:[%s1036 + $0x20] sm:$0xff]
      %v1042 = vld [vmem:[%s1036 + $0x28] sm:$0xff]
      %v1043 = vld [vmem:[%s1036 + $0x30] sm:$0xff]
      %v1044 = vld [vmem:[%s1036 + $0x38] sm:$0xff]
      %v1053 = vunpack.c.l.b16 %v1037
      %v1054 = vunpack.c.h.b16 %v1037
      %v1055 = vunpack.c.l.b16 %v1038
      %v1056 = vunpack.c.h.b16 %v1038
      %v1057 = vunpack.c.l.b16 %v1039
      %v1058 = vunpack.c.h.b16 %v1039
      %v1059 = vunpack.c.l.b16 %v1040
      %v1060 = vunpack.c.h.b16 %v1040
      %v1061 = vunpack.c.l.b16 %v1041
      %v1062 = vunpack.c.h.b16 %v1041
      %v1063 = vunpack.c.l.b16 %v1042
      %v1064 = vunpack.c.h.b16 %v1042
      %v1065 = vunpack.c.l.b16 %v1043
      %v1066 = vunpack.c.h.b16 %v1043
      %v1067 = vunpack.c.l.b16 %v1044
      %v1068 = vunpack.c.h.b16 %v1044
      %v1069 = vpack.c.b16 %v1055, %v1053
      %v1070 = vpack.c.b16 %v1056, %v1054
      %v1071 = vpack.c.b16 %v1059, %v1057
      %v1072 = vpack.c.b16 %v1060, %v1058
      %v1073 = vpack.c.b16 %v1063, %v1061
      %v1074 = vpack.c.b16 %v1064, %v1062
      %v1075 = vpack.c.b16 %v1067, %v1065
      %v1076 = vpack.c.b16 %v1068, %v1066
      %v1086 = vsel %vm603, %v1034, 0
      %v1089 = vsel %vm603, %v1035, 0
      %1091 = vmatprep.subr.bf16.mxu0 %v1070
      %1092 = vmatpush1.bf16.msra.mxu0 %v1069
      %1093 = vmatprep.subr.bf16.mxu0 %v1072
      %1094 = vmatpush1.bf16.msra.mxu0 %v1071
      %1095 = vmatprep.subr.bf16.mxu0 %v1074
      %1096 = vmatpush1.bf16.msra.mxu0 %v1073
      %1097 = vmatprep.subr.bf16.mxu0 %v1076
      %1098 = vmatpush1.bf16.msra.mxu0 %v1075
      %1099 = vmatprep.subr.bf16.mxu0 0
      %1100 = vmatpush1.bf16.msra.mxu0 0
      %1101 = vmatprep.subr.bf16.mxu0 0
      %1102 = vmatpush1.bf16.msra.mxu0 0
      %1103 = vmatprep.subr.bf16.mxu0 0
      %1104 = vmatpush1.bf16.msra.mxu0 0
      %1105 = vmatprep.subr.bf16.mxu0 0
      %1106 = vmatpush1.bf16.msra.mxu0 0
      %1107 = vmatprep.subr.bf16.mxu0 0
      %1108 = vmatpush1.bf16.msra.mxu0 0
      %1109 = vmatprep.subr.bf16.mxu0 0
      %1110 = vmatpush1.bf16.msra.mxu0 0
      %1111 = vmatprep.subr.bf16.mxu0 0
      %1112 = vmatpush1.bf16.msra.mxu0 0
      %1113 = vmatprep.subr.bf16.mxu0 0
      %1114 = vmatpush1.bf16.msra.mxu0 0
      %1115 = vmatprep.subr.bf16.mxu0 0
      %1116 = vmatpush1.bf16.msra.mxu0 0
      %1117 = vmatprep.subr.bf16.mxu0 0
      %1118 = vmatpush1.bf16.msra.mxu0 0
      %1119 = vmatprep.subr.bf16.mxu0 0
      %1120 = vmatpush1.bf16.msra.mxu0 0
      %1121 = vmatprep.subr.bf16.mxu0 0
      %1122 = vmatpush1.bf16.msra.mxu0 0
      %1123 = vmatprep.mubr.bf16.mxu0 0
      %1124 = vmatmul.mubr.bf16.gmra.mrb[0].mxu0 %v1086
      %v1125 = vpop.f32.mrb[0].mxu0
      %v1126 = vadd.f32 0.0, %v1125
      %v1127 = vpop.f32.mrb[0].mxu0
      %v1128 = vadd.f32 0.0, %v1127
      %v1129 = vpop.f32.mrb[0].mxu0
      %v1130 = vadd.f32 0.0, %v1129
      %v1131 = vpop.f32.mrb[0].mxu0
      %v1132 = vadd.f32 0.0, %v1131
      %1133 = vmatprep.mubr.bf16.mxu0 0
      %1134 = vmatmul.mubr.bf16.gmra.mrb[0].mxu0 %v1089
      %v1135 = vpop.f32.mrb[0].mxu0
      %v1136 = vadd.f32 0.0, %v1135
      %v1137 = vpop.f32.mrb[0].mxu0
      %v1138 = vadd.f32 0.0, %v1137
      %v1139 = vpop.f32.mrb[0].mxu0
      %v1140 = vadd.f32 0.0, %v1139
      %v1141 = vpop.f32.mrb[0].mxu0
      %v1142 = vadd.f32 0.0, %v1141
      %1143 = vdwg.mxu0
      %v1152 = vunpack.c.l.b16 %v1014
      %v1153 = vunpack.c.h.b16 %v1014
      %v1154 = vunpack.c.l.b16 %v1015
      %v1155 = vunpack.c.h.b16 %v1015
      %v1156 = vunpack.c.l.b16 %v1016
      %v1157 = vunpack.c.h.b16 %v1016
      %v1158 = vunpack.c.l.b16 %v1017
      %v1159 = vunpack.c.h.b16 %v1017
      %v1160 = vunpack.c.l.b16 %v1018
      %v1161 = vunpack.c.h.b16 %v1018
      %v1162 = vunpack.c.l.b16 %v1019
      %v1163 = vunpack.c.h.b16 %v1019
      %v1164 = vunpack.c.l.b16 %v1020
      %v1165 = vunpack.c.h.b16 %v1020
      %v1166 = vunpack.c.l.b16 %v1021
      %v1167 = vunpack.c.h.b16 %v1021
      %v1168 = vpack.c.b16 %v1154, %v1152
      %v1169 = vpack.c.b16 %v1155, %v1153
      %v1170 = vpack.c.b16 %v1158, %v1156
      %v1171 = vpack.c.b16 %v1159, %v1157
      %v1172 = vpack.c.b16 %v1162, %v1160
      %v1173 = vpack.c.b16 %v1163, %v1161
      %v1174 = vpack.c.b16 %v1166, %v1164
      %v1175 = vpack.c.b16 %v1167, %v1165
      %v1185 = vsel %vm603, %v1011, 0
      %v1188 = vsel %vm603, %v1012, 0
      %1190 = vmatprep.subr.bf16.mxu0 %v1169
      %1191 = vmatpush1.bf16.msra.mxu0 %v1168
      %1192 = vmatprep.subr.bf16.mxu0 %v1171
      %1193 = vmatpush1.bf16.msra.mxu0 %v1170
      %1194 = vmatprep.subr.bf16.mxu0 %v1173
      %1195 = vmatpush1.bf16.msra.mxu0 %v1172
      %1196 = vmatprep.subr.bf16.mxu0 %v1175
      %1197 = vmatpush1.bf16.msra.mxu0 %v1174
      %1198 = vmatprep.subr.bf16.mxu0 0
      %1199 = vmatpush1.bf16.msra.mxu0 0
      %1200 = vmatprep.subr.bf16.mxu0 0
      %1201 = vmatpush1.bf16.msra.mxu0 0
      %1202 = vmatprep.subr.bf16.mxu0 0
      %1203 = vmatpush1.bf16.msra.mxu0 0
      %1204 = vmatprep.subr.bf16.mxu0 0
      %1205 = vmatpush1.bf16.msra.mxu0 0
      %1206 = vmatprep.subr.bf16.mxu0 0
      %1207 = vmatpush1.bf16.msra.mxu0 0
      %1208 = vmatprep.subr.bf16.mxu0 0
      %1209 = vmatpush1.bf16.msra.mxu0 0
      %1210 = vmatprep.subr.bf16.mxu0 0
      %1211 = vmatpush1.bf16.msra.mxu0 0
      %1212 = vmatprep.subr.bf16.mxu0 0
      %1213 = vmatpush1.bf16.msra.mxu0 0
      %1214 = vmatprep.subr.bf16.mxu0 0
      %1215 = vmatpush1.bf16.msra.mxu0 0
      %1216 = vmatprep.subr.bf16.mxu0 0
      %1217 = vmatpush1.bf16.msra.mxu0 0
      %1218 = vmatprep.subr.bf16.mxu0 0
      %1219 = vmatpush1.bf16.msra.mxu0 0
      %1220 = vmatprep.subr.bf16.mxu0 0
      %1221 = vmatpush1.bf16.msra.mxu0 0
      %1222 = vmatprep.mubr.bf16.mxu0 0
      %1223 = vmatmul.mubr.bf16.gmra.mrb[0].mxu0 %v1185
      %v1224 = vpop.f32.mrb[0].mxu0
      %v1225 = vadd.f32 %v1126, %v1224
      %v1226 = vpop.f32.mrb[0].mxu0
      %v1227 = vadd.f32 %v1128, %v1226
      %v1228 = vpop.f32.mrb[0].mxu0
      %v1229 = vadd.f32 %v1130, %v1228
      %v1230 = vpop.f32.mrb[0].mxu0
      %v1231 = vadd.f32 %v1132, %v1230
      %1232 = vmatprep.mubr.bf16.mxu0 0
      %1233 = vmatmul.mubr.bf16.gmra.mrb[0].mxu0 %v1188
      %v1234 = vpop.f32.mrb[0].mxu0
      %v1235 = vadd.f32 %v1136, %v1234
      %v1236 = vpop.f32.mrb[0].mxu0
      %v1237 = vadd.f32 %v1138, %v1236
      %v1238 = vpop.f32.mrb[0].mxu0
      %v1239 = vadd.f32 %v1140, %v1238
      %v1240 = vpop.f32.mrb[0].mxu0
      %v1241 = vadd.f32 %v1142, %v1240
      %1242 = vdwg.mxu0
      %v1243 = vadd.f32 %v982, %v1225
      %v1244 = vadd.f32 %v983, %v1227
      %v1245 = vadd.f32 %v984, %v1229
      %v1246 = vadd.f32 %v985, %v1231
      %v1247 = vadd.f32 %v986, %v1235
      %v1248 = vadd.f32 %v987, %v1237
      %v1249 = vadd.f32 %v988, %v1239
      %v1250 = vadd.f32 %v989, %v1241
      %v1251 = vld [vmem:[%s6] sm:$0x3]
      %v1253 = vlaneseq
      %v1254 = vshrl.u32 %v1253, 7
      %v1255 = vsub.s32 0, %v1254
      %v1256 = vrot.slane %v1251, %v1255
      %v1257 = vlaneseq
      %v1258 = vshrl.u32 %v1257, 7
      %v1259 = vsub.s32 1, %v1258
      %v1260 = vrot.slane %v1251, %v1259
      %v1263 = vadd.f32 %v1243, %v1256
      %v1264 = vadd.f32 %v1244, %v1260
      %v1265 = vadd.f32 %v1245, %v1256
      %v1266 = vadd.f32 %v1246, %v1260
      %v1267 = vadd.f32 %v1247, %v1256
      %v1268 = vadd.f32 %v1248, %v1260
      %v1269 = vadd.f32 %v1249, %v1256
      %v1270 = vadd.f32 %v1250, %v1260
      %v1271 = vmax.f32 %v1263, 0.0
      %v1272 = vmax.f32 %v1264, 0.0
      %v1273 = vmax.f32 %v1265, 0.0
      %v1274 = vmax.f32 %v1266, 0.0
      %v1275 = vmax.f32 %v1267, 0.0
      %v1276 = vmax.f32 %v1268, 0.0
      %v1277 = vmax.f32 %v1269, 0.0
      %v1278 = vmax.f32 %v1270, 0.0
      %1279 = vst [vmem:[%s307] sm:$0xff] %v1271
      %1280 = vst [vmem:[%s307 + $0x8] sm:$0xff] %v1272
      %1281 = vst [vmem:[%s307 + $0x10] sm:$0xff] %v1273
      %1282 = vst [vmem:[%s307 + $0x18] sm:$0xff] %v1274
      %1283 = vst [vmem:[%s307 + $0x20] sm:$0xff] %v1275
      %1284 = vst [vmem:[%s307 + $0x28] sm:$0xff] %v1276
      %1285 = vst [vmem:[%s307 + $0x30] sm:$0xff] %v1277
      %1286 = vst [vmem:[%s307 + $0x38] sm:$0xff] %v1278
      %s1287 = smul.u32 2, %s18
      %p1288 = scmp.lt.s32.totalorder %s1287, 3
      %s1289 = scalar_select %p1288, %s1287, 3
      %s1290 = smul.addr %s1289, 4
      %s1291 = smul.addr %s1290, 8
      %s1292 = scalar_lea.vmem %s7, %s1291
      // Predicated region
      $region49: #{forward.1} parent=47 // pred_check
        %p1293 = pneg %p193
      $region50: #{forward.1} parent=47 // pred_check_branch
        %1295 = sbr.rel (%p1293) target = $region52
      $region51: #{forward.1} parent=47 // pred_region
        %s1296 = smul.u32 2, %s18
      $region52: #{forward.1} parent=47 // pred_fallthru
        _
    $region48: #{forward.1} parent=5 // pred_fallthru
      _
    %p1297 = scmp.le.s32.totalorder 2, %s13
    // Predicated region
    $region53: #{forward.1} parent=5 // pred_check
      %p1298 = pneg %p1297
    $region54: #{forward.1} parent=5 // pred_check_branch
      %1300 = sbr.rel (%p1298) target = $region56
    $region55: #{forward.1} parent=5 // pred_region
      %s1301 = ssub.s32 %s13, 2
      // Predicated region
      $region57: #{forward.1} parent=55 // pred_check
        %p1302 = pneg %p199
      $region58: #{forward.1} parent=55 // pred_check_branch
        %1304 = sbr.rel (%p1302) target = $region60
      $region59: #{forward.1} parent=55 // pred_region
        %s1305 = smul.u32 2, %s19
        %p1306 = scmp.lt.s32.totalorder %s1305, 3
        %s1307 = scalar_select %p1306, %s1305, 3
        %s1308 = smul.addr %s1307, 4
        %s1309 = smul.addr %s1308, 8
        %s1310 = scalar_lea.vmem %s7, %s1309
      $region60: #{forward.1} parent=55 // pred_fallthru
        _
    $region56: #{forward.1} parent=5 // pred_fallthru
      _
  $region6: #{forward.1} parent=0 // loop_footer
    %s17 = sadd.s32 1, %s13
  $region7: #{forward.1} parent=0 // loop_footer_branch
    %12 = sbr.rel target = $region3
  $region8: #{forward.1} parent=0 // loop_exit
    _

</llo_original>
